<compile_context>
chip_gen: v7x
topology: tpu7x:2x2x1
jax: 0.10.0
libtpu: 0.0.40
codegen_flags: <defaults>
</compile_context>

<pallas_src>
import functools

import jax
import jax.numpy as jnp
from jax.experimental import pallas as pl
from jax.experimental.pallas import tpu as pltpu


LANE = 128
SUBLANE_BF16 = 16


def _round_up(x, m):
    return (x + m - 1) // m * m


def _full_spec(shape):
    return pl.BlockSpec(shape, lambda: (0,) * len(shape))


# ----------------------------------------------------------------------------
# Fused Pallas kernel: inProj -> (num_layers+1) SAGEConv -> log_softmax
# ----------------------------------------------------------------------------
def gcn_fused_kernel(a_ref, x_ref, win_ref, bin_ref, wl_ref, wr_ref, bc_ref,
                     o_ref, h_scr, inp_scr, *, n_convs, out_valid):
    f32 = jnp.float32
    bf16 = jnp.bfloat16

    # ---- inProj (Linear in->hidden, bias); residual stored pre-scaled by 0.2 ----
    h0 = jnp.dot(x_ref[...], win_ref[...], preferred_element_type=f32) + bin_ref[...]
    inp_scr[...] = (0.2 * h0).astype(bf16)           # 0.2 * inp, bf16 resident
    h_scr[...] = jnp.maximum(h0, 0.0).astype(bf16)   # relu(inp), bf16 resident

    a = a_ref[...]  # bf16 row-normalized adjacency (SAGEConv mean aggregation)

    # Static unroll: n_convs is small (<= 4) at these depths.
    for l in range(n_convs):
        last = (l == n_convs - 1)
        hb = h_scr[...]                                            # bf16, no cast
        agg = jnp.dot(a, hb, preferred_element_type=f32)           # mean aggregation
        out = (jnp.dot(agg.astype(bf16), wl_ref[l], preferred_element_type=f32)
               + jnp.dot(hb, wr_ref[l], preferred_element_type=f32)
               + bc_ref[l])                                        # f32 logits/features

        if not last:
            # relu; dropout is identity in eval; residual (+0.2*inp already folded in)
            h_scr[...] = (jnp.maximum(out, 0.0) + inp_scr[...]).astype(bf16)
        else:
            # fused log_softmax over the `out_valid` real columns (rest is lane padding).
            # Mask in f32 BEFORE exp so padded lanes underflow to exactly 0.
            col = jax.lax.broadcasted_iota(jnp.int32, out.shape, 1)
            logits = jnp.where(col < out_valid, out, -1e30)
            m = jnp.max(logits, axis=-1, keepdims=True)
            s = logits - m
            lse = jnp.log(jnp.sum(jnp.exp(s), axis=-1, keepdims=True))
            o_ref[...] = (s - lse).astype(o_ref.dtype)             # bf16 store


# ----------------------------------------------------------------------------
# One-time preparation (hoisted out of the per-call jitted forward)
# ----------------------------------------------------------------------------
def _pad2(w, r, c):
    return jnp.pad(w, ((0, r - w.shape[0]), (0, c - w.shape[1])))


def prepare_params(params):
    """Pad feature dims to lane-dense 128, stack conv weights, cast to bf16. Run ONCE."""
    in_c = params["inproj_w"].shape[0]
    hid = params["inproj_w"].shape[1]
    out_c = params["convs"][-1]["wl"].shape[1]
    in_p = _round_up(in_c, LANE)
    feat_p = _round_up(max(hid, out_c), LANE)  # shared padded width (hidden & output)

    win = _pad2(params["inproj_w"], in_p, feat_p).astype(jnp.bfloat16)
    b_in = _pad2(params["inproj_b"], 1, feat_p).astype(jnp.float32)
    wl = jnp.stack([_pad2(c["wl"], feat_p, feat_p) for c in params["convs"]]).astype(jnp.bfloat16)
    wr = jnp.stack([_pad2(c["wr"], feat_p, feat_p) for c in params["convs"]]).astype(jnp.bfloat16)
    bc = jnp.stack([_pad2(c["bl"], 1, feat_p) for c in params["convs"]]).astype(jnp.float32)
    return {"win": win, "b_in": b_in, "wl": wl, "wr": wr, "bc": bc,
            "in_p": in_p, "feat_p": feat_p, "out_c": out_c}


def prepare_graph(x, adj_mean, in_p):
    """Pad node count to a multiple of 16 (bf16 sublanes), cast A/x to bf16. Run ONCE per graph."""
    n = x.shape[0]
    n_p = _round_up(n, SUBLANE_BF16)
    x_p = jnp.pad(x, ((0, n_p - n), (0, in_p - x.shape[1]))).astype(jnp.bfloat16)
    a_b = jnp.pad(adj_mean, ((0, n_p - n), (0, n_p - n))).astype(jnp.bfloat16)
    return x_p, a_b


# ----------------------------------------------------------------------------
# Jitted forward: exactly one fused pallas_call, padded bf16 output
# ----------------------------------------------------------------------------
@functools.partial(jax.jit, static_argnames=("out_valid",))
def gcn_forward(a_b, x_p, win, b_in, wl, wr, bc, *, out_valid):
    n_p = a_b.shape[0]
    feat_p = win.shape[1]
    n_convs = wl.shape[0]

    # VMEM budget from actual resident buffers (+2x headroom), capped at v7x physical.
    resident = (a_b.size * 2 + x_p.size * 2 + win.size * 2 + b_in.size * 4
                + wl.size * 2 + wr.size * 2 + bc.size * 4
                + n_p * feat_p * 2            # bf16 output
                + 2 * n_p * feat_p * 2)       # bf16 h / inp scratch
    vmem_limit = int(min(max(2 * resident, 32 << 20), 64 << 20))

    kern = functools.partial(gcn_fused_kernel, n_convs=n_convs, out_valid=out_valid)
    return pl.pallas_call(
        kern,
        out_shape=jax.ShapeDtypeStruct((n_p, feat_p), jnp.bfloat16),
        in_specs=[_full_spec(a_b.shape), _full_spec(x_p.shape),
                  _full_spec(win.shape), _full_spec(b_in.shape),
                  _full_spec(wl.shape), _full_spec(wr.shape), _full_spec(bc.shape)],
        out_specs=_full_spec((n_p, feat_p)),
        scratch_shapes=[pltpu.VMEM((n_p, feat_p), jnp.bfloat16),   # h
                        pltpu.VMEM((n_p, feat_p), jnp.bfloat16)],  # 0.2 * inp
        compiler_params=pltpu.CompilerParams(vmem_limit_bytes=vmem_limit),
    )(a_b, x_p, win, b_in, wl, wr, bc)


# ----------------------------------------------------------------------------
# Pure-JAX references
# ----------------------------------------------------------------------------
def gcn_forward_ref_bf16(x, adj_mean, params):
    """Mirror the kernel's bf16-operand / f32-accumulate / bf16-resident math."""
    f32, bf = jnp.float32, jnp.bfloat16
    a = adj_mean.astype(bf)
    h0 = jnp.dot(x.astype(bf), params["inproj_w"].astype(bf),
                 preferred_element_type=f32) + params["inproj_b"]
    inp = (0.2 * h0).astype(bf)
    h = jnp.maximum(h0, 0.0).astype(bf)
    nc = len(params["convs"])
    out_final = None
    for i, c in enumerate(params["convs"]):
        last = (i == nc - 1)
        agg = jnp.dot(a, h, preferred_element_type=f32)
        out = (jnp.dot(agg.astype(bf), c["wl"].astype(bf), preferred_element_type=f32)
               + jnp.dot(h, c["wr"].astype(bf), preferred_element_type=f32)
               + c["bl"])
        if not last:
            h = (jnp.maximum(out, 0.0) + inp.astype(f32)).astype(bf)
        else:
            out_final = out
    res = jax.nn.log_softmax(out_final, axis=-1)
    return res.astype(bf).astype(f32)   # mirror the kernel's bf16 output store


def gcn_forward_ref_f32(x, adj_mean, params):
    """Original full-precision formulation (loose semantic check)."""
    h = x @ params["inproj_w"] + params["inproj_b"]
    inp = h
    h = jnp.maximum(h, 0.0)
    nc = len(params["convs"])
    for i, c in enumerate(params["convs"]):
        agg = adj_mean @ h
        out = agg @ c["wl"] + c["bl"] + h @ c["wr"]
        h = jnp.maximum(out, 0.0) + 0.2 * inp if i != nc - 1 else out
    return jax.nn.log_softmax(h, axis=-1)


# ----------------------------------------------------------------------------
# Graph / parameter construction
# ----------------------------------------------------------------------------
def build_mean_adj(edge_index, num_nodes):
    """Row-normalized (mean) aggregation matrix: A[dst, src] = 1/deg(dst)."""
    # TODO(synk): dense N x N adjacency caps N at a few thousand; real cluster-GCN
    #             sizes need a block-sparse / row-streamed representation.
    src, dst = edge_index[0], edge_index[1]
    a = jnp.zeros((num_nodes, num_nodes), jnp.float32).at[dst, src].add(1.0)
    deg = a.sum(axis=1, keepdims=True)
    return jnp.where(deg > 0, a / jnp.maximum(deg, 1.0), 0.0)


def init_params(key, in_channels, hidden_channels, out_channels, num_layers):
    keys = jax.random.split(key, 2 + 3 * (num_layers + 1))
    params = {
        # weights stored pre-transposed to (in, out)
        "inproj_w": 0.1 * jax.random.normal(keys[0], (in_channels, hidden_channels), jnp.float32),
        "inproj_b": 0.1 * jax.random.normal(keys[1], (1, hidden_channels), jnp.float32),
        "convs": [],
    }
    dims = [(hidden_channels, hidden_channels)] * num_layers + [(hidden_channels, out_channels)]
    for li, (din, dout) in enumerate(dims):
        k0, k1, k2 = keys[2 + 3 * li: 5 + 3 * li]
        params["convs"].append({
            "wl": 0.1 * jax.random.normal(k0, (din, dout), jnp.float32),  # lin_l (with bias)
            "bl": 0.1 * jax.random.normal(k1, (1, dout), jnp.float32),
            "wr": 0.1 * jax.random.normal(k2, (din, dout), jnp.float32),  # lin_r (no bias)
        })
    # NOTE: self.linear and self.weights exist in __init__ but are unused in forward().
    return params


if __name__ == "__main__":
    N = 128             # nodes (already multiple of 16)
    E = 512             # edges
    IN_C, HID, OUT_C = 16, 32, 8
    NUM_LAYERS = 2      # -> 3 SAGEConv layers total

    key = jax.random.PRNGKey(0)
    kx, ke_src, ke_dst, kp = jax.random.split(key, 4)

    x = jax.random.normal(kx, (N, IN_C), jnp.float32)
    edge_index = jnp.stack([
        jax.random.randint(ke_src, (E,), 0, N),
        jax.random.randint(ke_dst, (E,), 0, N),
    ], axis=0)

    adj_mean = build_mean_adj(edge_index, N)
    params = init_params(kp, IN_C, HID, OUT_C, NUM_LAYERS)

    # One-time preparation (kept out of the per-call hot path).
    prep = prepare_params(params)
    x_p, a_b = prepare_graph(x, adj_mean, prep["in_p"])

    out_p = jax.block_until_ready(
        gcn_forward(a_b, x_p, prep["win"], prep["b_in"],
                    prep["wl"], prep["wr"], prep["bc"], out_valid=prep["out_c"]))
    assert out_p.shape == (N, prep["feat_p"]) and out_p.dtype == jnp.bfloat16

    # Slice / cast only for the correctness check (outside the jitted hot path).
    out = out_p[:N, :OUT_C].astype(jnp.float32)

    ref_bf16 = gcn_forward_ref_bf16(x, adj_mean, params)
    assert jnp.allclose(out, ref_bf16, atol=2e-2, rtol=2e-2), \
        float(jnp.max(jnp.abs(out - ref_bf16)))

    ref_f32 = gcn_forward_ref_f32(x, adj_mean, params)
    assert jnp.allclose(out, ref_f32, atol=1e-1, rtol=1e-1), \
        float(jnp.max(jnp.abs(out - ref_f32)))

    print("KERNEL_OK")
</pallas_src>

<mosaic_0001>
module attributes {stable_mosaic.version = 11 : i64} {
  func.func @gcn_fused_kernel(%arg0: memref<128x128xbf16, #tpu.memory_space<vmem>>, %arg1: memref<128x128xbf16, #tpu.memory_space<vmem>>, %arg2: memref<128x128xbf16, #tpu.memory_space<vmem>>, %arg3: memref<1x128xf32, #tpu.memory_space<vmem>>, %arg4: memref<3x128x128xbf16, #tpu.memory_space<vmem>>, %arg5: memref<3x128x128xbf16, #tpu.memory_space<vmem>>, %arg6: memref<3x1x128xf32, #tpu.memory_space<vmem>>, %arg7: memref<128x128xbf16, #tpu.memory_space<vmem>>, %arg8: memref<128x128xbf16, #tpu.memory_space<vmem>>, %arg9: memref<128x128xbf16, #tpu.memory_space<vmem>>) attributes {dimension_semantics = [], scalar_prefetch = 0 : i64, scratch_operands = 2 : i64, tpu.core_type = #tpu.core_type<tc>} {
    %c0 = arith.constant 0 : index
    %c0_0 = arith.constant 0 : index
    %0 = vector.load %arg1[%c0, %c0_0] : memref<128x128xbf16, #tpu.memory_space<vmem>>, vector<128x128xbf16>
    %c0_1 = arith.constant 0 : index
    %c0_2 = arith.constant 0 : index
    %1 = vector.load %arg2[%c0_1, %c0_2] : memref<128x128xbf16, #tpu.memory_space<vmem>>, vector<128x128xbf16>
    %cst = arith.constant dense<0.000000e+00> : vector<128x128xf32>
    %2 = tpu.matmul %0, %1, %cst {dimension_numbers = #tpu.dot_dimension_numbers<[1], [0], [0], [1], [0, 0, 1, 1], [], []>} : vector<128x128xbf16>, vector<128x128xbf16>, vector<128x128xf32> -> vector<128x128xf32>
    %c0_3 = arith.constant 0 : index
    %c0_4 = arith.constant 0 : index
    %3 = vector.load %arg3[%c0_3, %c0_4] : memref<1x128xf32, #tpu.memory_space<vmem>>, vector<1x128xf32>
    %4 = vector.broadcast %3 : vector<1x128xf32> to vector<128x128xf32>
    %5 = arith.addf %2, %4 : vector<128x128xf32>
    %cst_5 = arith.constant 2.000000e-01 : f32
    %6 = vector.broadcast %cst_5 : f32 to vector<128x128xf32>
    %7 = arith.mulf %6, %5 : vector<128x128xf32>
    %8 = arith.truncf %7 : vector<128x128xf32> to vector<128x128xbf16>
    %c0_6 = arith.constant 0 : index
    %c0_7 = arith.constant 0 : index
    %9 = vector.load %arg9[%c0_6, %c0_7] : memref<128x128xbf16, #tpu.memory_space<vmem>>, vector<128x128xbf16>
    tpu.vector_store %arg9[%c0_6, %c0_7], %8 {strides = array<i32>} : memref<128x128xbf16, #tpu.memory_space<vmem>>, vector<128x128xbf16>,
    %cst_8 = arith.constant 0.000000e+00 : f32
    %10 = vector.broadcast %cst_8 : f32 to vector<128x128xf32>
    %11 = arith.maximumf %5, %10 : vector<128x128xf32>
    %12 = arith.truncf %11 : vector<128x128xf32> to vector<128x128xbf16>
    %c0_9 = arith.constant 0 : index
    %c0_10 = arith.constant 0 : index
    %13 = vector.load %arg8[%c0_9, %c0_10] : memref<128x128xbf16, #tpu.memory_space<vmem>>, vector<128x128xbf16>
    tpu.vector_store %arg8[%c0_9, %c0_10], %12 {strides = array<i32>} : memref<128x128xbf16, #tpu.memory_space<vmem>>, vector<128x128xbf16>,
    %c0_11 = arith.constant 0 : index
    %c0_12 = arith.constant 0 : index
    %14 = vector.load %arg0[%c0_11, %c0_12] : memref<128x128xbf16, #tpu.memory_space<vmem>>, vector<128x128xbf16>
    %c0_13 = arith.constant 0 : index
    %c0_14 = arith.constant 0 : index
    %15 = vector.load %arg8[%c0_13, %c0_14] : memref<128x128xbf16, #tpu.memory_space<vmem>>, vector<128x128xbf16>
    %cst_15 = arith.constant dense<0.000000e+00> : vector<128x128xf32>
    %16 = tpu.matmul %14, %15, %cst_15 {dimension_numbers = #tpu.dot_dimension_numbers<[1], [0], [0], [1], [0, 0, 1, 1], [], []>} : vector<128x128xbf16>, vector<128x128xbf16>, vector<128x128xf32> -> vector<128x128xf32>
    %17 = arith.truncf %16 : vector<128x128xf32> to vector<128x128xbf16>
    %c0_16 = arith.constant 0 : index
    %c0_17 = arith.constant 0 : index
    %c0_18 = arith.constant 0 : index
    %18 = vector.load %arg4[%c0_16, %c0_17, %c0_18] : memref<3x128x128xbf16, #tpu.memory_space<vmem>>, vector<1x128x128xbf16>
    %19 = vector.shape_cast %18 : vector<1x128x128xbf16> to vector<128x128xbf16>
    %cst_19 = arith.constant dense<0.000000e+00> : vector<128x128xf32>
    %20 = tpu.matmul %17, %19, %cst_19 {dimension_numbers = #tpu.dot_dimension_numbers<[1], [0], [0], [1], [0, 0, 1, 1], [], []>} : vector<128x128xbf16>, vector<128x128xbf16>, vector<128x128xf32> -> vector<128x128xf32>
    %c0_20 = arith.constant 0 : index
    %c0_21 = arith.constant 0 : index
    %c0_22 = arith.constant 0 : index
    %21 = vector.load %arg5[%c0_20, %c0_21, %c0_22] : memref<3x128x128xbf16, #tpu.memory_space<vmem>>, vector<1x128x128xbf16>
    %22 = vector.shape_cast %21 : vector<1x128x128xbf16> to vector<128x128xbf16>
    %cst_23 = arith.constant dense<0.000000e+00> : vector<128x128xf32>
    %23 = tpu.matmul %15, %22, %cst_23 {dimension_numbers = #tpu.dot_dimension_numbers<[1], [0], [0], [1], [0, 0, 1, 1], [], []>} : vector<128x128xbf16>, vector<128x128xbf16>, vector<128x128xf32> -> vector<128x128xf32>
    %24 = arith.addf %20, %23 : vector<128x128xf32>
    %c0_24 = arith.constant 0 : index
    %c0_25 = arith.constant 0 : index
    %c0_26 = arith.constant 0 : index
    %25 = vector.load %arg6[%c0_24, %c0_25, %c0_26] : memref<3x1x128xf32, #tpu.memory_space<vmem>>, vector<1x1x128xf32>
    %26 = vector.shape_cast %25 : vector<1x1x128xf32> to vector<1x128xf32>
    %27 = vector.broadcast %26 : vector<1x128xf32> to vector<128x128xf32>
    %28 = arith.addf %24, %27 : vector<128x128xf32>
    %cst_27 = arith.constant 0.000000e+00 : f32
    %29 = vector.broadcast %cst_27 : f32 to vector<128x128xf32>
    %30 = arith.maximumf %28, %29 : vector<128x128xf32>
    %c0_28 = arith.constant 0 : index
    %c0_29 = arith.constant 0 : index
    %31 = vector.load %arg9[%c0_28, %c0_29] : memref<128x128xbf16, #tpu.memory_space<vmem>>, vector<128x128xbf16>
    %32 = arith.extf %31 : vector<128x128xbf16> to vector<128x128xf32>
    %33 = arith.addf %30, %32 : vector<128x128xf32>
    %34 = arith.truncf %33 : vector<128x128xf32> to vector<128x128xbf16>
    %c0_30 = arith.constant 0 : index
    %c0_31 = arith.constant 0 : index
    %35 = vector.load %arg8[%c0_30, %c0_31] : memref<128x128xbf16, #tpu.memory_space<vmem>>, vector<128x128xbf16>
    tpu.vector_store %arg8[%c0_30, %c0_31], %34 {strides = array<i32>} : memref<128x128xbf16, #tpu.memory_space<vmem>>, vector<128x128xbf16>,
    %c0_32 = arith.constant 0 : index
    %c0_33 = arith.constant 0 : index
    %36 = vector.load %arg8[%c0_32, %c0_33] : memref<128x128xbf16, #tpu.memory_space<vmem>>, vector<128x128xbf16>
    %cst_34 = arith.constant dense<0.000000e+00> : vector<128x128xf32>
    %37 = tpu.matmul %14, %36, %cst_34 {dimension_numbers = #tpu.dot_dimension_numbers<[1], [0], [0], [1], [0, 0, 1, 1], [], []>} : vector<128x128xbf16>, vector<128x128xbf16>, vector<128x128xf32> -> vector<128x128xf32>
    %38 = arith.truncf %37 : vector<128x128xf32> to vector<128x128xbf16>
    %c1 = arith.constant 1 : index
    %c0_35 = arith.constant 0 : index
    %c0_36 = arith.constant 0 : index
    %39 = vector.load %arg4[%c1, %c0_35, %c0_36] : memref<3x128x128xbf16, #tpu.memory_space<vmem>>, vector<1x128x128xbf16>
    %40 = vector.shape_cast %39 : vector<1x128x128xbf16> to vector<128x128xbf16>
    %cst_37 = arith.constant dense<0.000000e+00> : vector<128x128xf32>
    %41 = tpu.matmul %38, %40, %cst_37 {dimension_numbers = #tpu.dot_dimension_numbers<[1], [0], [0], [1], [0, 0, 1, 1], [], []>} : vector<128x128xbf16>, vector<128x128xbf16>, vector<128x128xf32> -> vector<128x128xf32>
    %c1_38 = arith.constant 1 : index
    %c0_39 = arith.constant 0 : index
    %c0_40 = arith.constant 0 : index
    %42 = vector.load %arg5[%c1_38, %c0_39, %c0_40] : memref<3x128x128xbf16, #tpu.memory_space<vmem>>, vector<1x128x128xbf16>
    %43 = vector.shape_cast %42 : vector<1x128x128xbf16> to vector<128x128xbf16>
    %cst_41 = arith.constant dense<0.000000e+00> : vector<128x128xf32>
    %44 = tpu.matmul %36, %43, %cst_41 {dimension_numbers = #tpu.dot_dimension_numbers<[1], [0], [0], [1], [0, 0, 1, 1], [], []>} : vector<128x128xbf16>, vector<128x128xbf16>, vector<128x128xf32> -> vector<128x128xf32>
    %45 = arith.addf %41, %44 : vector<128x128xf32>
    %c1_42 = arith.constant 1 : index
    %c0_43 = arith.constant 0 : index
    %c0_44 = arith.constant 0 : index
    %46 = vector.load %arg6[%c1_42, %c0_43, %c0_44] : memref<3x1x128xf32, #tpu.memory_space<vmem>>, vector<1x1x128xf32>
    %47 = vector.shape_cast %46 : vector<1x1x128xf32> to vector<1x128xf32>
    %48 = vector.broadcast %47 : vector<1x128xf32> to vector<128x128xf32>
    %49 = arith.addf %45, %48 : vector<128x128xf32>
    %cst_45 = arith.constant 0.000000e+00 : f32
    %50 = vector.broadcast %cst_45 : f32 to vector<128x128xf32>
    %51 = arith.maximumf %49, %50 : vector<128x128xf32>
    %c0_46 = arith.constant 0 : index
    %c0_47 = arith.constant 0 : index
    %52 = vector.load %arg9[%c0_46, %c0_47] : memref<128x128xbf16, #tpu.memory_space<vmem>>, vector<128x128xbf16>
    %53 = arith.extf %52 : vector<128x128xbf16> to vector<128x128xf32>
    %54 = arith.addf %51, %53 : vector<128x128xf32>
    %55 = arith.truncf %54 : vector<128x128xf32> to vector<128x128xbf16>
    %c0_48 = arith.constant 0 : index
    %c0_49 = arith.constant 0 : index
    %56 = vector.load %arg8[%c0_48, %c0_49] : memref<128x128xbf16, #tpu.memory_space<vmem>>, vector<128x128xbf16>
    tpu.vector_store %arg8[%c0_48, %c0_49], %55 {strides = array<i32>} : memref<128x128xbf16, #tpu.memory_space<vmem>>, vector<128x128xbf16>,
    %c0_50 = arith.constant 0 : index
    %c0_51 = arith.constant 0 : index
    %57 = vector.load %arg8[%c0_50, %c0_51] : memref<128x128xbf16, #tpu.memory_space<vmem>>, vector<128x128xbf16>
    %cst_52 = arith.constant dense<0.000000e+00> : vector<128x128xf32>
    %58 = tpu.matmul %14, %57, %cst_52 {dimension_numbers = #tpu.dot_dimension_numbers<[1], [0], [0], [1], [0, 0, 1, 1], [], []>} : vector<128x128xbf16>, vector<128x128xbf16>, vector<128x128xf32> -> vector<128x128xf32>
    %59 = arith.truncf %58 : vector<128x128xf32> to vector<128x128xbf16>
    %c2 = arith.constant 2 : index
    %c0_53 = arith.constant 0 : index
    %c0_54 = arith.constant 0 : index
    %60 = vector.load %arg4[%c2, %c0_53, %c0_54] : memref<3x128x128xbf16, #tpu.memory_space<vmem>>, vector<1x128x128xbf16>
    %61 = vector.shape_cast %60 : vector<1x128x128xbf16> to vector<128x128xbf16>
    %cst_55 = arith.constant dense<0.000000e+00> : vector<128x128xf32>
    %62 = tpu.matmul %59, %61, %cst_55 {dimension_numbers = #tpu.dot_dimension_numbers<[1], [0], [0], [1], [0, 0, 1, 1], [], []>} : vector<128x128xbf16>, vector<128x128xbf16>, vector<128x128xf32> -> vector<128x128xf32>
    %c2_56 = arith.constant 2 : index
    %c0_57 = arith.constant 0 : index
    %c0_58 = arith.constant 0 : index
    %63 = vector.load %arg5[%c2_56, %c0_57, %c0_58] : memref<3x128x128xbf16, #tpu.memory_space<vmem>>, vector<1x128x128xbf16>
    %64 = vector.shape_cast %63 : vector<1x128x128xbf16> to vector<128x128xbf16>
    %cst_59 = arith.constant dense<0.000000e+00> : vector<128x128xf32>
    %65 = tpu.matmul %57, %64, %cst_59 {dimension_numbers = #tpu.dot_dimension_numbers<[1], [0], [0], [1], [0, 0, 1, 1], [], []>} : vector<128x128xbf16>, vector<128x128xbf16>, vector<128x128xf32> -> vector<128x128xf32>
    %66 = arith.addf %62, %65 : vector<128x128xf32>
    %c2_60 = arith.constant 2 : index
    %c0_61 = arith.constant 0 : index
    %c0_62 = arith.constant 0 : index
    %67 = vector.load %arg6[%c2_60, %c0_61, %c0_62] : memref<3x1x128xf32, #tpu.memory_space<vmem>>, vector<1x1x128xf32>
    %68 = vector.shape_cast %67 : vector<1x1x128xf32> to vector<1x128xf32>
    %69 = vector.broadcast %68 : vector<1x128xf32> to vector<128x128xf32>
    %70 = arith.addf %66, %69 : vector<128x128xf32>
    %71 = tpu.iota {dimensions = array<i32: 1>} : vector<128x128xi32>
    %c8_i32 = arith.constant 8 : i32
    %72 = vector.broadcast %c8_i32 : i32 to vector<128x128xi32>
    %73 = arith.cmpi slt, %71, %72 : vector<128x128xi32>
    %cst_63 = arith.constant -1.000000e+30 : f32
    %74 = vector.broadcast %cst_63 : f32 to vector<128x128xf32>
    %75 = arith.select %73, %70, %74 : vector<128x128xi1>, vector<128x128xf32>
    %cst_64 = arith.constant dense<0xFF800000> : vector<128xf32>
    %76 = vector.multi_reduction <maximumf>, %75, %cst_64 [1] : vector<128x128xf32> to vector<128xf32>
    %77 = vector.shape_cast %76 : vector<128xf32> to vector<128x1xf32>
    %78 = vector.broadcast %77 : vector<128x1xf32> to vector<128x128xf32>
    %79 = arith.subf %75, %78 : vector<128x128xf32>
    %80 = math.exp %79 : vector<128x128xf32>
    %cst_65 = arith.constant dense<0.000000e+00> : vector<128xf32>
    %81 = vector.multi_reduction <add>, %80, %cst_65 [1] : vector<128x128xf32> to vector<128xf32>
    %82 = vector.shape_cast %81 : vector<128xf32> to vector<128x1xf32>
    %83 = math.log %82 : vector<128x1xf32>
    %84 = vector.broadcast %83 : vector<128x1xf32> to vector<128x128xf32>
    %85 = arith.subf %79, %84 : vector<128x128xf32>
    %86 = arith.truncf %85 : vector<128x128xf32> to vector<128x128xbf16>
    %c0_66 = arith.constant 0 : index
    %c0_67 = arith.constant 0 : index
    %87 = vector.load %arg7[%c0_66, %c0_67] : memref<128x128xbf16, #tpu.memory_space<vmem>>, vector<128x128xbf16>
    tpu.vector_store %arg7[%c0_66, %c0_67], %86 {strides = array<i32>} : memref<128x128xbf16, #tpu.memory_space<vmem>>, vector<128x128xbf16>,
    return
  }
}

</mosaic_0001>

<llo_original>
// kernel: gcn_forward.1
$region0: #{gcn_forward.1}
  #allocation0 [shape = 'u32[]', space=smem, size = 0x4, offset = 0x4, fixed_abs, tag = 'smem constant byte address 0x4 - core index']
  #allocation1 [shape = 'u32[144,128]{1,0:T(1,128)}', space=vmem, size = 0x12000, scoped, tag = 'internal scratch']
  #allocation2 [shape = 'bf16[128,128]{1,0:T(16,128)(2,1)}', space=vmem, size = 0x8000, scoped, tag = 'scratch operand']
  #allocation3 [shape = 'bf16[128,128]{1,0:T(16,128)(2,1)}', space=vmem, size = 0x8000, scoped, tag = 'scratch operand']
  %s0 = inlined_call_operand.hbm [shape: bf16[128,128], index: 0, kind: input, shape index: {}]
  %s1 = inlined_call_operand.hbm [shape: bf16[128,128], index: 1, kind: input, shape index: {}]
  %s2 = inlined_call_operand.hbm [shape: bf16[128,128], index: 2, kind: input, shape index: {}]
  %s3 = inlined_call_operand.vmem [shape: f32[1,128], index: 3, kind: input, shape index: {}]
  %s4 = inlined_call_operand.hbm [shape: bf16[3,128,128], index: 4, kind: input, shape index: {}]
  %s5 = inlined_call_operand.hbm [shape: bf16[3,128,128], index: 5, kind: input, shape index: {}]
  %s6 = inlined_call_operand.vmem [shape: f32[3,1,128], index: 6, kind: input, shape index: {}]
  %s7 = inlined_call_operand.hbm [shape: bf16[128,128], index: 7, kind: output, shape index: {}]
  %s8 = sld [smem:[#allocation0]]
  $region58: #{gcn_forward.1} parent=0
    _
  %s10 = ssub.s32 1, %s8
  %s11 = scalar_select 0, %s10, %s8
  $region1: #{gcn_forward.1} parent=0
    #allocation4 [shape = 'u8[32768]{0}', space=vmem, size = 0x8000, scoped, tag = 'input window, operand 0, single buffered']
    #allocation5 [shape = 's32[1]{0}', space=sflag, size = 0x4, scoped, tag = 'scoped memory for gcn_forward.1']
    #allocation6 [shape = 's32[1]{0}', space=sflag, size = 0x4, scoped, tag = 'scoped memory for gcn_forward.1']
    #allocation7 [shape = 'u8[32768]{0}', space=vmem, size = 0x8000, scoped, tag = 'input window, operand 1, single buffered']
    #allocation8 [shape = 's32[1]{0}', space=sflag, size = 0x4, scoped, tag = 'scoped memory for gcn_forward.1']
    #allocation9 [shape = 'u8[32768]{0}', space=vmem, size = 0x8000, scoped, tag = 'input window, operand 2, single buffered']
    #allocation10 [shape = 'u8[98304]{0}', space=vmem, size = 0x18000, scoped, tag = 'input window, operand 4, single buffered']
    #allocation11 [shape = 's32[1]{0}', space=sflag, size = 0x4, scoped, tag = 'scoped memory for gcn_forward.1']
    #allocation12 [shape = 'u8[98304]{0}', space=vmem, size = 0x18000, scoped, tag = 'input window, operand 5, single buffered']
    #allocation13 [shape = 'u8[32768]{0}', space=vmem, size = 0x8000, scoped, tag = 'output window, operand 0, single buffered']
    %12 = vsyncpa [#allocation5], 0
    %13 = vsyncpa [#allocation8], 0
    %14 = vsyncpa [#allocation11], 0
    %15 = vsyncpa [#allocation6], 0
    // Predicated region
    $region2: #{gcn_forward.1} parent=1 // pred_check
      _
    $region3: #{gcn_forward.1} parent=1 // pred_check_branch
      %17 = sbr.rel (0) target = $region5
    $region4: #{gcn_forward.1} parent=1 // pred_region
      %s19 = ssub.s32 1024, 1024
      %20 = vsyncadd [#allocation5], %s19
      %s21 = sshll.u32 [#allocation4], 4
      %s22 = int_to_ptr.vmem [resolvable:$true] %s21
      %27 = dma.hbm_to_vmem [thread:$0]  %s0, 1024, %s22, [#allocation5], 64, 64, 4
    $region5: #{gcn_forward.1} parent=1 // pred_fallthru
      _
    // Predicated region
    $region6: #{gcn_forward.1} parent=1 // pred_check
      _
    $region7: #{gcn_forward.1} parent=1 // pred_check_branch
      %29 = sbr.rel (0) target = $region9
    $region8: #{gcn_forward.1} parent=1 // pred_region
      %s31 = ssub.s32 1024, 1024
      %32 = vsyncadd [#allocation8], %s31
      %s33 = sshll.u32 [#allocation7], 4
      %s34 = int_to_ptr.vmem [resolvable:$true] %s33
      %39 = dma.hbm_to_vmem [thread:$0]  %s1, 1024, %s34, [#allocation8], 64, 64, 4
    $region9: #{gcn_forward.1} parent=1 // pred_fallthru
      _
    // Predicated region
    $region10: #{gcn_forward.1} parent=1 // pred_check
      _
    $region11: #{gcn_forward.1} parent=1 // pred_check_branch
      %41 = sbr.rel (0) target = $region13
    $region12: #{gcn_forward.1} parent=1 // pred_region
      %s43 = ssub.s32 1024, 1024
      %44 = vsyncadd [#allocation8], %s43
      %s45 = sshll.u32 [#allocation9], 4
      %s46 = int_to_ptr.vmem [resolvable:$true] %s45
      %51 = dma.hbm_to_vmem [thread:$0]  %s2, 1024, %s46, [#allocation8], 64, 64, 4
    $region13: #{gcn_forward.1} parent=1 // pred_fallthru
      _
    // Predicated region
    $region14: #{gcn_forward.1} parent=1 // pred_check
      _
    $region15: #{gcn_forward.1} parent=1 // pred_check_branch
      %53 = sbr.rel (0) target = $region17
    $region16: #{gcn_forward.1} parent=1 // pred_region
      _
    $region17: #{gcn_forward.1} parent=1 // pred_fallthru
      _
    // Predicated region
    $region18: #{gcn_forward.1} parent=1 // pred_check
      _
    $region19: #{gcn_forward.1} parent=1 // pred_check_branch
      %55 = sbr.rel (0) target = $region21
    $region20: #{gcn_forward.1} parent=1 // pred_region
      %s57 = ssub.s32 3072, 3072
      %58 = vsyncadd [#allocation11], %s57
      %s59 = sshll.u32 [#allocation10], 4
      %s60 = int_to_ptr.vmem [resolvable:$true] %s59
      %65 = dma.hbm_to_vmem [thread:$0]  %s4, 3072, %s60, [#allocation11], 64, 64, 4
    $region21: #{gcn_forward.1} parent=1 // pred_fallthru
      _
    // Predicated region
    $region22: #{gcn_forward.1} parent=1 // pred_check
      _
    $region23: #{gcn_forward.1} parent=1 // pred_check_branch
      %67 = sbr.rel (0) target = $region25
    $region24: #{gcn_forward.1} parent=1 // pred_region
      %s69 = ssub.s32 3072, 3072
      %70 = vsyncadd [#allocation11], %s69
      %s71 = sshll.u32 [#allocation12], 4
      %s72 = int_to_ptr.vmem [resolvable:$true] %s71
      %77 = dma.hbm_to_vmem [thread:$0]  %s5, 3072, %s72, [#allocation11], 64, 64, 4
    $region25: #{gcn_forward.1} parent=1 // pred_fallthru
      _
    // Predicated region
    $region26: #{gcn_forward.1} parent=1 // pred_check
      _
    $region27: #{gcn_forward.1} parent=1 // pred_check_branch
      %79 = sbr.rel (0) target = $region29
    $region28: #{gcn_forward.1} parent=1 // pred_region
      _
    $region29: #{gcn_forward.1} parent=1 // pred_fallthru
      _
    // Predicated region
    $region30: #{gcn_forward.1} parent=1 // pred_check
      _
    $region31: #{gcn_forward.1} parent=1 // pred_check_branch
      %81 = sbr.rel (0) target = $region33
    $region32: #{gcn_forward.1} parent=1 // pred_region
      %82 = dma.done [#allocation5], 1024
    $region33: #{gcn_forward.1} parent=1 // pred_fallthru
      _
    // Predicated region
    $region34: #{gcn_forward.1} parent=1 // pred_check
      _
    $region35: #{gcn_forward.1} parent=1 // pred_check_branch
      %84 = sbr.rel (0) target = $region37
    $region36: #{gcn_forward.1} parent=1 // pred_region
      %85 = dma.done [#allocation8], 1024
    $region37: #{gcn_forward.1} parent=1 // pred_fallthru
      _
    // Predicated region
    $region38: #{gcn_forward.1} parent=1 // pred_check
      _
    $region39: #{gcn_forward.1} parent=1 // pred_check_branch
      %87 = sbr.rel (0) target = $region41
    $region40: #{gcn_forward.1} parent=1 // pred_region
      %88 = dma.done [#allocation8], 1024
    $region41: #{gcn_forward.1} parent=1 // pred_fallthru
      _
    // Predicated region
    $region42: #{gcn_forward.1} parent=1 // pred_check
      _
    $region43: #{gcn_forward.1} parent=1 // pred_check_branch
      %90 = sbr.rel (0) target = $region45
    $region44: #{gcn_forward.1} parent=1 // pred_region
      %91 = dma.done [#allocation11], 3072
    $region45: #{gcn_forward.1} parent=1 // pred_fallthru
      _
    // Predicated region
    $region46: #{gcn_forward.1} parent=1 // pred_check
      _
    $region47: #{gcn_forward.1} parent=1 // pred_check_branch
      %93 = sbr.rel (0) target = $region49
    $region48: #{gcn_forward.1} parent=1 // pred_region
      %94 = dma.done [#allocation11], 3072
    $region49: #{gcn_forward.1} parent=1 // pred_fallthru
      _
    %v96 = vld [vmem:[#allocation7] sm:$0xf]
    %v97 = vld [vmem:[#allocation7 + $0x4] sm:$0xf]
    %v98 = vld [vmem:[#allocation7 + $0x8] sm:$0xf]
    %v99 = vld [vmem:[#allocation7 + $0xc] sm:$0xf]
    %v100 = vld [vmem:[#allocation7 + $0x10] sm:$0xf]
    %v101 = vld [vmem:[#allocation7 + $0x14] sm:$0xf]
    %v102 = vld [vmem:[#allocation7 + $0x18] sm:$0xf]
    %v103 = vld [vmem:[#allocation7 + $0x1c] sm:$0xf]
    %v104 = vld [vmem:[#allocation7 + $0x20] sm:$0xf]
    %v105 = vld [vmem:[#allocation7 + $0x24] sm:$0xf]
    %v106 = vld [vmem:[#allocation7 + $0x28] sm:$0xf]
    %v107 = vld [vmem:[#allocation7 + $0x2c] sm:$0xf]
    %v108 = vld [vmem:[#allocation7 + $0x30] sm:$0xf]
    %v109 = vld [vmem:[#allocation7 + $0x34] sm:$0xf]
    %v110 = vld [vmem:[#allocation7 + $0x38] sm:$0xf]
    %v111 = vld [vmem:[#allocation7 + $0x3c] sm:$0xf]
    %v112 = vld [vmem:[#allocation9] sm:$0xf]
    %v113 = vld [vmem:[#allocation9 + $0x4] sm:$0xf]
    %v114 = vld [vmem:[#allocation9 + $0x8] sm:$0xf]
    %v115 = vld [vmem:[#allocation9 + $0xc] sm:$0xf]
    %v116 = vld [vmem:[#allocation9 + $0x10] sm:$0xf]
    %v117 = vld [vmem:[#allocation9 + $0x14] sm:$0xf]
    %v118 = vld [vmem:[#allocation9 + $0x18] sm:$0xf]
    %v119 = vld [vmem:[#allocation9 + $0x1c] sm:$0xf]
    %v120 = vld [vmem:[#allocation9 + $0x20] sm:$0xf]
    %v121 = vld [vmem:[#allocation9 + $0x24] sm:$0xf]
    %v122 = vld [vmem:[#allocation9 + $0x28] sm:$0xf]
    %v123 = vld [vmem:[#allocation9 + $0x2c] sm:$0xf]
    %v124 = vld [vmem:[#allocation9 + $0x30] sm:$0xf]
    %v125 = vld [vmem:[#allocation9 + $0x34] sm:$0xf]
    %v126 = vld [vmem:[#allocation9 + $0x38] sm:$0xf]
    %v127 = vld [vmem:[#allocation9 + $0x3c] sm:$0xf]
    %v128 = vld [vmem:[%s3] sm:$0x1]
    %v130 = vlaneseq
    %v131 = vshrl.u32 %v130, 7
    %v132 = vsub.s32 0, %v131
    %v133 = vrot.slane %v128, %v132
    %v151 = vunpack.c.l.b16 %v96
    %v152 = vunpack.c.l.b16 %v97
    %v153 = vunpack.c.l.b16 %v98
    %v154 = vunpack.c.l.b16 %v99
    %v155 = vunpack.c.l.b16 %v100
    %v156 = vunpack.c.l.b16 %v101
    %v157 = vunpack.c.l.b16 %v102
    %v158 = vunpack.c.l.b16 %v103
    %v159 = vunpack.c.l.b16 %v104
    %v160 = vunpack.c.l.b16 %v105
    %v161 = vunpack.c.l.b16 %v106
    %v162 = vunpack.c.l.b16 %v107
    %v163 = vunpack.c.l.b16 %v108
    %v164 = vunpack.c.l.b16 %v109
    %v165 = vunpack.c.l.b16 %v110
    %v166 = vunpack.c.l.b16 %v111
    %v167 = vpack.c.b16 %v152, %v151
    %v168 = vpack.c.b16 %v154, %v153
    %v169 = vpack.c.b16 %v156, %v155
    %v170 = vpack.c.b16 %v158, %v157
    %v171 = vpack.c.b16 %v160, %v159
    %v172 = vpack.c.b16 %v162, %v161
    %v173 = vpack.c.b16 %v164, %v163
    %v174 = vpack.c.b16 %v166, %v165
    %v199 = vunpack.c.l.b16 %v112
    %v200 = vunpack.c.l.b16 %v113
    %v201 = vunpack.c.l.b16 %v114
    %v202 = vunpack.c.l.b16 %v115
    %v203 = vunpack.c.l.b16 %v116
    %v204 = vunpack.c.l.b16 %v117
    %v205 = vunpack.c.l.b16 %v118
    %v206 = vunpack.c.l.b16 %v119
    %v207 = vunpack.c.l.b16 %v120
    %v208 = vunpack.c.l.b16 %v121
    %v209 = vunpack.c.l.b16 %v122
    %v210 = vunpack.c.l.b16 %v123
    %v211 = vunpack.c.l.b16 %v124
    %v212 = vunpack.c.l.b16 %v125
    %v213 = vunpack.c.l.b16 %v126
    %v214 = vunpack.c.l.b16 %v127
    %v215 = vpack.c.b16 %v200, %v199
    %v216 = vpack.c.b16 %v202, %v201
    %v217 = vpack.c.b16 %v204, %v203
    %v218 = vpack.c.b16 %v206, %v205
    %v219 = vpack.c.b16 %v208, %v207
    %v220 = vpack.c.b16 %v210, %v209
    %v221 = vpack.c.b16 %v212, %v211
    %v222 = vpack.c.b16 %v214, %v213
    %231 = vmatprep.subr.bf16.mxu0 0
    %232 = vmatpush1.bf16.msra.mxu0 %v215
    %233 = vmatprep.subr.bf16.mxu0 0
    %234 = vmatpush1.bf16.msra.mxu0 %v216
    %235 = vmatprep.subr.bf16.mxu0 0
    %236 = vmatpush1.bf16.msra.mxu0 %v217
    %237 = vmatprep.subr.bf16.mxu0 0
    %238 = vmatpush1.bf16.msra.mxu0 %v218
    %239 = vmatprep.subr.bf16.mxu0 0
    %240 = vmatpush1.bf16.msra.mxu0 %v219
    %241 = vmatprep.subr.bf16.mxu0 0
    %242 = vmatpush1.bf16.msra.mxu0 %v220
    %243 = vmatprep.subr.bf16.mxu0 0
    %244 = vmatpush1.bf16.msra.mxu0 %v221
    %245 = vmatprep.subr.bf16.mxu0 0
    %246 = vmatpush1.bf16.msra.mxu0 %v222
    %247 = vmatprep.subr.bf16.mxu0 0
    %248 = vmatpush1.bf16.msra.mxu0 0
    %249 = vmatprep.subr.bf16.mxu0 0
    %250 = vmatpush1.bf16.msra.mxu0 0
    %251 = vmatprep.subr.bf16.mxu0 0
    %252 = vmatpush1.bf16.msra.mxu0 0
    %253 = vmatprep.subr.bf16.mxu0 0
    %254 = vmatpush1.bf16.msra.mxu0 0
    %255 = vmatprep.subr.bf16.mxu0 0
    %256 = vmatpush1.bf16.msra.mxu0 0
    %257 = vmatprep.subr.bf16.mxu0 0
    %258 = vmatpush1.bf16.msra.mxu0 0
    %259 = vmatprep.subr.bf16.mxu0 0
    %260 = vmatpush1.bf16.msra.mxu0 0
    %261 = vmatprep.subr.bf16.mxu0 0
    %262 = vmatpush1.bf16.msra.mxu0 0
    %263 = vmatprep.mubr.bf16.mxu0 0
    %264 = vmatmul.mubr.bf16.gmra.mrb[0].mxu0 %v167
    %v265 = vpop.f32.mrb[0].mxu0
    %v266 = vadd.f32 %v133, %v265
    %v267 = vpop.f32.mrb[0].mxu0
    %v268 = vpop.f32.mrb[0].mxu0
    %v269 = vadd.f32 %v133, %v268
    %v270 = vpop.f32.mrb[0].mxu0
    %271 = vmatprep.mubr.bf16.mxu0 0
    %272 = vmatmul.mubr.bf16.gmra.mrb[0].mxu0 %v168
    %v273 = vpop.f32.mrb[0].mxu0
    %v274 = vadd.f32 %v133, %v273
    %v275 = vpop.f32.mrb[0].mxu0
    %v276 = vpop.f32.mrb[0].mxu0
    %v277 = vadd.f32 %v133, %v276
    %v278 = vpop.f32.mrb[0].mxu0
    %279 = vmatprep.mubr.bf16.mxu0 0
    %280 = vmatmul.mubr.bf16.gmra.mrb[0].mxu0 %v169
    %v281 = vpop.f32.mrb[0].mxu0
    %v282 = vadd.f32 %v133, %v281
    %v283 = vpop.f32.mrb[0].mxu0
    %v284 = vpop.f32.mrb[0].mxu0
    %v285 = vadd.f32 %v133, %v284
    %v286 = vpop.f32.mrb[0].mxu0
    %287 = vmatprep.mubr.bf16.mxu0 0
    %288 = vmatmul.mubr.bf16.gmra.mrb[0].mxu0 %v170
    %v289 = vpop.f32.mrb[0].mxu0
    %v290 = vadd.f32 %v133, %v289
    %v291 = vpop.f32.mrb[0].mxu0
    %v292 = vpop.f32.mrb[0].mxu0
    %v293 = vadd.f32 %v133, %v292
    %v294 = vpop.f32.mrb[0].mxu0
    %295 = vmatprep.mubr.bf16.mxu0 0
    %296 = vmatmul.mubr.bf16.gmra.mrb[0].mxu0 %v171
    %v297 = vpop.f32.mrb[0].mxu0
    %v298 = vadd.f32 %v133, %v297
    %v299 = vpop.f32.mrb[0].mxu0
    %v300 = vpop.f32.mrb[0].mxu0
    %v301 = vadd.f32 %v133, %v300
    %v302 = vpop.f32.mrb[0].mxu0
    %303 = vmatprep.mubr.bf16.mxu0 0
    %304 = vmatmul.mubr.bf16.gmra.mrb[0].mxu0 %v172
    %v305 = vpop.f32.mrb[0].mxu0
    %v306 = vadd.f32 %v133, %v305
    %v307 = vpop.f32.mrb[0].mxu0
    %v308 = vpop.f32.mrb[0].mxu0
    %v309 = vadd.f32 %v133, %v308
    %v310 = vpop.f32.mrb[0].mxu0
    %311 = vmatprep.mubr.bf16.mxu0 0
    %312 = vmatmul.mubr.bf16.gmra.mrb[0].mxu0 %v173
    %v313 = vpop.f32.mrb[0].mxu0
    %v314 = vadd.f32 %v133, %v313
    %v315 = vpop.f32.mrb[0].mxu0
    %v316 = vpop.f32.mrb[0].mxu0
    %v317 = vadd.f32 %v133, %v316
    %v318 = vpop.f32.mrb[0].mxu0
    %319 = vmatprep.mubr.bf16.mxu0 0
    %320 = vmatmul.mubr.bf16.gmra.mrb[0].mxu0 %v174
    %v321 = vpop.f32.mrb[0].mxu0
    %v322 = vadd.f32 %v133, %v321
    %v323 = vpop.f32.mrb[0].mxu0
    %v324 = vpop.f32.mrb[0].mxu0
    %v325 = vadd.f32 %v133, %v324
    %v326 = vpop.f32.mrb[0].mxu0
    %327 = vdwg.mxu0
    %v328 = vmul.f32 %v266, 0.2
    %v329 = vmul.f32 %v269, 0.2
    %v330 = vmul.f32 %v274, 0.2
    %v331 = vmul.f32 %v277, 0.2
    %v332 = vmul.f32 %v282, 0.2
    %v333 = vmul.f32 %v285, 0.2
    %v334 = vmul.f32 %v290, 0.2
    %v335 = vmul.f32 %v293, 0.2
    %v336 = vmul.f32 %v298, 0.2
    %v337 = vmul.f32 %v301, 0.2
    %v338 = vmul.f32 %v306, 0.2
    %v339 = vmul.f32 %v309, 0.2
    %v340 = vmul.f32 %v314, 0.2
    %v341 = vmul.f32 %v317, 0.2
    %v342 = vmul.f32 %v322, 0.2
    %v343 = vmul.f32 %v325, 0.2
    %v344 = vpack.c.bf16 %v329, %v328
    %v345 = vpack.c.bf16 %v331, %v330
    %v346 = vpack.c.bf16 %v333, %v332
    %v347 = vpack.c.bf16 %v335, %v334
    %v348 = vpack.c.bf16 %v337, %v336
    %v349 = vpack.c.bf16 %v339, %v338
    %v350 = vpack.c.bf16 %v341, %v340
    %v351 = vpack.c.bf16 %v343, %v342
    %352 = vst [vmem:[#allocation3] sm:$0xff] %v344
    %353 = vst [vmem:[#allocation3 + $0x8] sm:$0xff] %v345
    %354 = vst [vmem:[#allocation3 + $0x10] sm:$0xff] %v346
    %355 = vst [vmem:[#allocation3 + $0x18] sm:$0xff] %v347
    %356 = vst [vmem:[#allocation3 + $0x20] sm:$0xff] %v348
    %357 = vst [vmem:[#allocation3 + $0x28] sm:$0xff] %v349
    %358 = vst [vmem:[#allocation3 + $0x30] sm:$0xff] %v350
    %359 = vst [vmem:[#allocation3 + $0x38] sm:$0xff] %v351
    %v360 = vmax.f32 %v266, 0.0
    %v361 = vmax.f32 %v269, 0.0
    %v362 = vmax.f32 %v274, 0.0
    %v363 = vmax.f32 %v277, 0.0
    %v364 = vmax.f32 %v282, 0.0
    %v365 = vmax.f32 %v285, 0.0
    %v366 = vmax.f32 %v290, 0.0
    %v367 = vmax.f32 %v293, 0.0
    %v368 = vmax.f32 %v298, 0.0
    %v369 = vmax.f32 %v301, 0.0
    %v370 = vmax.f32 %v306, 0.0
    %v371 = vmax.f32 %v309, 0.0
    %v372 = vmax.f32 %v314, 0.0
    %v373 = vmax.f32 %v317, 0.0
    %v374 = vmax.f32 %v322, 0.0
    %v375 = vmax.f32 %v325, 0.0
    %v376 = vpack.c.bf16 %v361, %v360
    %v377 = vpack.c.bf16 %v363, %v362
    %v378 = vpack.c.bf16 %v365, %v364
    %v379 = vpack.c.bf16 %v367, %v366
    %v380 = vpack.c.bf16 %v369, %v368
    %v381 = vpack.c.bf16 %v371, %v370
    %v382 = vpack.c.bf16 %v373, %v372
    %v383 = vpack.c.bf16 %v375, %v374
    %384 = vst [vmem:[#allocation2] sm:$0xff] %v376
    %385 = vst [vmem:[#allocation2 + $0x8] sm:$0xff] %v377
    %386 = vst [vmem:[#allocation2 + $0x10] sm:$0xff] %v378
    %387 = vst [vmem:[#allocation2 + $0x18] sm:$0xff] %v379
    %388 = vst [vmem:[#allocation2 + $0x20] sm:$0xff] %v380
    %389 = vst [vmem:[#allocation2 + $0x28] sm:$0xff] %v381
    %390 = vst [vmem:[#allocation2 + $0x30] sm:$0xff] %v382
    %391 = vst [vmem:[#allocation2 + $0x38] sm:$0xff] %v383
    %v392 = vld [vmem:[#allocation4] sm:$0xf]
    %v393 = vld [vmem:[#allocation4 + $0x4] sm:$0xf]
    %v394 = vld [vmem:[#allocation4 + $0x8] sm:$0xf]
    %v395 = vld [vmem:[#allocation4 + $0xc] sm:$0xf]
    %v396 = vld [vmem:[#allocation4 + $0x10] sm:$0xf]
    %v397 = vld [vmem:[#allocation4 + $0x14] sm:$0xf]
    %v398 = vld [vmem:[#allocation4 + $0x18] sm:$0xf]
    %v399 = vld [vmem:[#allocation4 + $0x1c] sm:$0xf]
    %v400 = vld [vmem:[#allocation4 + $0x20] sm:$0xf]
    %v401 = vld [vmem:[#allocation4 + $0x24] sm:$0xf]
    %v402 = vld [vmem:[#allocation4 + $0x28] sm:$0xf]
    %v403 = vld [vmem:[#allocation4 + $0x2c] sm:$0xf]
    %v404 = vld [vmem:[#allocation4 + $0x30] sm:$0xf]
    %v405 = vld [vmem:[#allocation4 + $0x34] sm:$0xf]
    %v406 = vld [vmem:[#allocation4 + $0x38] sm:$0xf]
    %v407 = vld [vmem:[#allocation4 + $0x3c] sm:$0xf]
    %v408 = vld [vmem:[#allocation2] sm:$0xff]
    %v409 = vld [vmem:[#allocation2 + $0x8] sm:$0xff]
    %v410 = vld [vmem:[#allocation2 + $0x10] sm:$0xff]
    %v411 = vld [vmem:[#allocation2 + $0x18] sm:$0xff]
    %v412 = vld [vmem:[#allocation2 + $0x20] sm:$0xff]
    %v413 = vld [vmem:[#allocation2 + $0x28] sm:$0xff]
    %v414 = vld [vmem:[#allocation2 + $0x30] sm:$0xff]
    %v415 = vld [vmem:[#allocation2 + $0x38] sm:$0xff]
    %v432 = vunpack.c.l.b16 %v392
    %v433 = vunpack.c.l.b16 %v393
    %v434 = vunpack.c.l.b16 %v394
    %v435 = vunpack.c.l.b16 %v395
    %v436 = vunpack.c.l.b16 %v396
    %v437 = vunpack.c.l.b16 %v397
    %v438 = vunpack.c.l.b16 %v398
    %v439 = vunpack.c.l.b16 %v399
    %v440 = vunpack.c.l.b16 %v400
    %v441 = vunpack.c.l.b16 %v401
    %v442 = vunpack.c.l.b16 %v402
    %v443 = vunpack.c.l.b16 %v403
    %v444 = vunpack.c.l.b16 %v404
    %v445 = vunpack.c.l.b16 %v405
    %v446 = vunpack.c.l.b16 %v406
    %v447 = vunpack.c.l.b16 %v407
    %v448 = vpack.c.b16 %v433, %v432
    %v449 = vpack.c.b16 %v435, %v434
    %v450 = vpack.c.b16 %v437, %v436
    %v451 = vpack.c.b16 %v439, %v438
    %v452 = vpack.c.b16 %v441, %v440
    %v453 = vpack.c.b16 %v443, %v442
    %v454 = vpack.c.b16 %v445, %v444
    %v455 = vpack.c.b16 %v447, %v446
    %464 = vmatprep.subr.bf16.mxu0 0
    %465 = vmatpush1.bf16.msra.mxu0 %v408
    %466 = vmatprep.subr.bf16.mxu0 0
    %467 = vmatpush1.bf16.msra.mxu0 %v409
    %468 = vmatprep.subr.bf16.mxu0 0
    %469 = vmatpush1.bf16.msra.mxu0 %v410
    %470 = vmatprep.subr.bf16.mxu0 0
    %471 = vmatpush1.bf16.msra.mxu0 %v411
    %472 = vmatprep.subr.bf16.mxu0 0
    %473 = vmatpush1.bf16.msra.mxu0 %v412
    %474 = vmatprep.subr.bf16.mxu0 0
    %475 = vmatpush1.bf16.msra.mxu0 %v413
    %476 = vmatprep.subr.bf16.mxu0 0
    %477 = vmatpush1.bf16.msra.mxu0 %v414
    %478 = vmatprep.subr.bf16.mxu0 0
    %479 = vmatpush1.bf16.msra.mxu0 %v415
    %480 = vmatprep.subr.bf16.mxu0 0
    %481 = vmatpush1.bf16.msra.mxu0 0
    %482 = vmatprep.subr.bf16.mxu0 0
    %483 = vmatpush1.bf16.msra.mxu0 0
    %484 = vmatprep.subr.bf16.mxu0 0
    %485 = vmatpush1.bf16.msra.mxu0 0
    %486 = vmatprep.subr.bf16.mxu0 0
    %487 = vmatpush1.bf16.msra.mxu0 0
    %488 = vmatprep.subr.bf16.mxu0 0
    %489 = vmatpush1.bf16.msra.mxu0 0
    %490 = vmatprep.subr.bf16.mxu0 0
    %491 = vmatpush1.bf16.msra.mxu0 0
    %492 = vmatprep.subr.bf16.mxu0 0
    %493 = vmatpush1.bf16.msra.mxu0 0
    %494 = vmatprep.subr.bf16.mxu0 0
    %495 = vmatpush1.bf16.msra.mxu0 0
    %496 = vmatprep.mubr.bf16.mxu0 0
    %497 = vmatmul.mubr.bf16.gmra.mrb[0].mxu0 %v448
    %v498 = vpop.f32.mrb[0].mxu0
    %v499 = vadd.f32 0.0, %v498
    %v500 = vpop.f32.mrb[0].mxu0
    %v501 = vpop.f32.mrb[0].mxu0
    %v502 = vadd.f32 0.0, %v501
    %v503 = vpop.f32.mrb[0].mxu0
    %504 = vmatprep.mubr.bf16.mxu0 0
    %505 = vmatmul.mubr.bf16.gmra.mrb[0].mxu0 %v449
    %v506 = vpop.f32.mrb[0].mxu0
    %v507 = vadd.f32 0.0, %v506
    %v508 = vpop.f32.mrb[0].mxu0
    %v509 = vpop.f32.mrb[0].mxu0
    %v510 = vadd.f32 0.0, %v509
    %v511 = vpop.f32.mrb[0].mxu0
    %512 = vmatprep.mubr.bf16.mxu0 0
    %513 = vmatmul.mubr.bf16.gmra.mrb[0].mxu0 %v450
    %v514 = vpop.f32.mrb[0].mxu0
    %v515 = vadd.f32 0.0, %v514
    %v516 = vpop.f32.mrb[0].mxu0
    %v517 = vpop.f32.mrb[0].mxu0
    %v518 = vadd.f32 0.0, %v517
    %v519 = vpop.f32.mrb[0].mxu0
    %520 = vmatprep.mubr.bf16.mxu0 0
    %521 = vmatmul.mubr.bf16.gmra.mrb[0].mxu0 %v451
    %v522 = vpop.f32.mrb[0].mxu0
    %v523 = vadd.f32 0.0, %v522
    %v524 = vpop.f32.mrb[0].mxu0
    %v525 = vpop.f32.mrb[0].mxu0
    %v526 = vadd.f32 0.0, %v525
    %v527 = vpop.f32.mrb[0].mxu0
    %528 = vmatprep.mubr.bf16.mxu0 0
    %529 = vmatmul.mubr.bf16.gmra.mrb[0].mxu0 %v452
    %v530 = vpop.f32.mrb[0].mxu0
    %v531 = vadd.f32 0.0, %v530
    %v532 = vpop.f32.mrb[0].mxu0
    %v533 = vpop.f32.mrb[0].mxu0
    %v534 = vadd.f32 0.0, %v533
    %v535 = vpop.f32.mrb[0].mxu0
    %536 = vmatprep.mubr.bf16.mxu0 0
    %537 = vmatmul.mubr.bf16.gmra.mrb[0].mxu0 %v453
    %v538 = vpop.f32.mrb[0].mxu0
    %v539 = vadd.f32 0.0, %v538
    %v540 = vpop.f32.mrb[0].mxu0
    %v541 = vpop.f32.mrb[0].mxu0
    %v542 = vadd.f32 0.0, %v541
    %v543 = vpop.f32.mrb[0].mxu0
    %544 = vmatprep.mubr.bf16.mxu0 0
    %545 = vmatmul.mubr.bf16.gmra.mrb[0].mxu0 %v454
    %v546 = vpop.f32.mrb[0].mxu0
    %v547 = vadd.f32 0.0, %v546
    %v548 = vpop.f32.mrb[0].mxu0
    %v549 = vpop.f32.mrb[0].mxu0
    %v550 = vadd.f32 0.0, %v549
    %v551 = vpop.f32.mrb[0].mxu0
    %552 = vmatprep.mubr.bf16.mxu0 0
    %553 = vmatmul.mubr.bf16.gmra.mrb[0].mxu0 %v455
    %v554 = vpop.f32.mrb[0].mxu0
    %v555 = vadd.f32 0.0, %v554
    %v556 = vpop.f32.mrb[0].mxu0
    %v557 = vpop.f32.mrb[0].mxu0
    %v558 = vadd.f32 0.0, %v557
    %v559 = vpop.f32.mrb[0].mxu0
    %560 = vdwg.mxu0
    %v561 = vpack.c.bf16 %v502, %v499
    %v562 = vpack.c.bf16 %v510, %v507
    %v563 = vpack.c.bf16 %v518, %v515
    %v564 = vpack.c.bf16 %v526, %v523
    %v565 = vpack.c.bf16 %v534, %v531
    %v566 = vpack.c.bf16 %v542, %v539
    %v567 = vpack.c.bf16 %v550, %v547
    %v568 = vpack.c.bf16 %v558, %v555
    %v569 = vld [vmem:[#allocation10] sm:$0xf]
    %v570 = vld [vmem:[#allocation10 + $0x4] sm:$0xf]
    %v571 = vld [vmem:[#allocation10 + $0x8] sm:$0xf]
    %v572 = vld [vmem:[#allocation10 + $0xc] sm:$0xf]
    %v573 = vld [vmem:[#allocation10 + $0x10] sm:$0xf]
    %v574 = vld [vmem:[#allocation10 + $0x14] sm:$0xf]
    %v575 = vld [vmem:[#allocation10 + $0x18] sm:$0xf]
    %v576 = vld [vmem:[#allocation10 + $0x1c] sm:$0xf]
    %v577 = vld [vmem:[#allocation10 + $0x20] sm:$0xf]
    %v578 = vld [vmem:[#allocation10 + $0x24] sm:$0xf]
    %v579 = vld [vmem:[#allocation10 + $0x28] sm:$0xf]
    %v580 = vld [vmem:[#allocation10 + $0x2c] sm:$0xf]
    %v581 = vld [vmem:[#allocation10 + $0x30] sm:$0xf]
    %v582 = vld [vmem:[#allocation10 + $0x34] sm:$0xf]
    %v583 = vld [vmem:[#allocation10 + $0x38] sm:$0xf]
    %v584 = vld [vmem:[#allocation10 + $0x3c] sm:$0xf]
    %v585 = vld [vmem:[#allocation12] sm:$0xf]
    %v586 = vld [vmem:[#allocation12 + $0x4] sm:$0xf]
    %v587 = vld [vmem:[#allocation12 + $0x8] sm:$0xf]
    %v588 = vld [vmem:[#allocation12 + $0xc] sm:$0xf]
    %v589 = vld [vmem:[#allocation12 + $0x10] sm:$0xf]
    %v590 = vld [vmem:[#allocation12 + $0x14] sm:$0xf]
    %v591 = vld [vmem:[#allocation12 + $0x18] sm:$0xf]
    %v592 = vld [vmem:[#allocation12 + $0x1c] sm:$0xf]
    %v593 = vld [vmem:[#allocation12 + $0x20] sm:$0xf]
    %v594 = vld [vmem:[#allocation12 + $0x24] sm:$0xf]
    %v595 = vld [vmem:[#allocation12 + $0x28] sm:$0xf]
    %v596 = vld [vmem:[#allocation12 + $0x2c] sm:$0xf]
    %v597 = vld [vmem:[#allocation12 + $0x30] sm:$0xf]
    %v598 = vld [vmem:[#allocation12 + $0x34] sm:$0xf]
    %v599 = vld [vmem:[#allocation12 + $0x38] sm:$0xf]
    %v600 = vld [vmem:[#allocation12 + $0x3c] sm:$0xf]
    %v617 = vunpack.c.l.b16 %v585
    %v618 = vunpack.c.l.b16 %v586
    %v619 = vunpack.c.l.b16 %v587
    %v620 = vunpack.c.l.b16 %v588
    %v621 = vunpack.c.l.b16 %v589
    %v622 = vunpack.c.l.b16 %v590
    %v623 = vunpack.c.l.b16 %v591
    %v624 = vunpack.c.l.b16 %v592
    %v625 = vunpack.c.l.b16 %v593
    %v626 = vunpack.c.l.b16 %v594
    %v627 = vunpack.c.l.b16 %v595
    %v628 = vunpack.c.l.b16 %v596
    %v629 = vunpack.c.l.b16 %v597
    %v630 = vunpack.c.l.b16 %v598
    %v631 = vunpack.c.l.b16 %v599
    %v632 = vunpack.c.l.b16 %v600
    %v633 = vpack.c.b16 %v618, %v617
    %v634 = vpack.c.b16 %v620, %v619
    %v635 = vpack.c.b16 %v622, %v621
    %v636 = vpack.c.b16 %v624, %v623
    %v637 = vpack.c.b16 %v626, %v625
    %v638 = vpack.c.b16 %v628, %v627
    %v639 = vpack.c.b16 %v630, %v629
    %v640 = vpack.c.b16 %v632, %v631
    %649 = vmatprep.subr.bf16.mxu0 0
    %650 = vmatpush1.bf16.msra.mxu0 %v633
    %651 = vmatprep.subr.bf16.mxu0 0
    %652 = vmatpush1.bf16.msra.mxu0 %v634
    %653 = vmatprep.subr.bf16.mxu0 0
    %654 = vmatpush1.bf16.msra.mxu0 %v635
    %655 = vmatprep.subr.bf16.mxu0 0
    %656 = vmatpush1.bf16.msra.mxu0 %v636
    %657 = vmatprep.subr.bf16.mxu0 0
    %658 = vmatpush1.bf16.msra.mxu0 %v637
    %659 = vmatprep.subr.bf16.mxu0 0
    %660 = vmatpush1.bf16.msra.mxu0 %v638
    %661 = vmatprep.subr.bf16.mxu0 0
    %662 = vmatpush1.bf16.msra.mxu0 %v639
    %663 = vmatprep.subr.bf16.mxu0 0
    %664 = vmatpush1.bf16.msra.mxu0 %v640
    %665 = vmatprep.subr.bf16.mxu0 0
    %666 = vmatpush1.bf16.msra.mxu0 0
    %667 = vmatprep.subr.bf16.mxu0 0
    %668 = vmatpush1.bf16.msra.mxu0 0
    %669 = vmatprep.subr.bf16.mxu0 0
    %670 = vmatpush1.bf16.msra.mxu0 0
    %671 = vmatprep.subr.bf16.mxu0 0
    %672 = vmatpush1.bf16.msra.mxu0 0
    %673 = vmatprep.subr.bf16.mxu0 0
    %674 = vmatpush1.bf16.msra.mxu0 0
    %675 = vmatprep.subr.bf16.mxu0 0
    %676 = vmatpush1.bf16.msra.mxu0 0
    %677 = vmatprep.subr.bf16.mxu0 0
    %678 = vmatpush1.bf16.msra.mxu0 0
    %679 = vmatprep.subr.bf16.mxu0 0
    %680 = vmatpush1.bf16.msra.mxu0 0
    %681 = vmatprep.mubr.bf16.mxu0 0
    %682 = vmatmul.mubr.bf16.gmra.mrb[0].mxu0 %v408
    %v683 = vpop.f32.mrb[0].mxu0
    %v684 = vadd.f32 0.0, %v683
    %v685 = vpop.f32.mrb[0].mxu0
    %v686 = vpop.f32.mrb[0].mxu0
    %v687 = vadd.f32 0.0, %v686
    %v688 = vpop.f32.mrb[0].mxu0
    %689 = vmatprep.mubr.bf16.mxu0 0
    %690 = vmatmul.mubr.bf16.gmra.mrb[0].mxu0 %v409
    %v691 = vpop.f32.mrb[0].mxu0
    %v692 = vadd.f32 0.0, %v691
    %v693 = vpop.f32.mrb[0].mxu0
    %v694 = vpop.f32.mrb[0].mxu0
    %v695 = vadd.f32 0.0, %v694
    %v696 = vpop.f32.mrb[0].mxu0
    %697 = vmatprep.mubr.bf16.mxu0 0
    %698 = vmatmul.mubr.bf16.gmra.mrb[0].mxu0 %v410
    %v699 = vpop.f32.mrb[0].mxu0
    %v700 = vadd.f32 0.0, %v699
    %v701 = vpop.f32.mrb[0].mxu0
    %v702 = vpop.f32.mrb[0].mxu0
    %v703 = vadd.f32 0.0, %v702
    %v704 = vpop.f32.mrb[0].mxu0
    %705 = vmatprep.mubr.bf16.mxu0 0
    %706 = vmatmul.mubr.bf16.gmra.mrb[0].mxu0 %v411
    %v707 = vpop.f32.mrb[0].mxu0
    %v708 = vadd.f32 0.0, %v707
    %v709 = vpop.f32.mrb[0].mxu0
    %v710 = vpop.f32.mrb[0].mxu0
    %v711 = vadd.f32 0.0, %v710
    %v712 = vpop.f32.mrb[0].mxu0
    %713 = vmatprep.mubr.bf16.mxu0 0
    %714 = vmatmul.mubr.bf16.gmra.mrb[0].mxu0 %v412
    %v715 = vpop.f32.mrb[0].mxu0
    %v716 = vadd.f32 0.0, %v715
    %v717 = vpop.f32.mrb[0].mxu0
    %v718 = vpop.f32.mrb[0].mxu0
    %v719 = vadd.f32 0.0, %v718
    %v720 = vpop.f32.mrb[0].mxu0
    %721 = vmatprep.mubr.bf16.mxu0 0
    %722 = vmatmul.mubr.bf16.gmra.mrb[0].mxu0 %v413
    %v723 = vpop.f32.mrb[0].mxu0
    %v724 = vadd.f32 0.0, %v723
    %v725 = vpop.f32.mrb[0].mxu0
    %v726 = vpop.f32.mrb[0].mxu0
    %v727 = vadd.f32 0.0, %v726
    %v728 = vpop.f32.mrb[0].mxu0
    %729 = vmatprep.mubr.bf16.mxu0 0
    %730 = vmatmul.mubr.bf16.gmra.mrb[0].mxu0 %v414
    %v731 = vpop.f32.mrb[0].mxu0
    %v732 = vadd.f32 0.0, %v731
    %v733 = vpop.f32.mrb[0].mxu0
    %v734 = vpop.f32.mrb[0].mxu0
    %v735 = vadd.f32 0.0, %v734
    %v736 = vpop.f32.mrb[0].mxu0
    %737 = vmatprep.mubr.bf16.mxu0 0
    %738 = vmatmul.mubr.bf16.gmra.mrb[0].mxu0 %v415
    %v739 = vpop.f32.mrb[0].mxu0
    %v740 = vadd.f32 0.0, %v739
    %v741 = vpop.f32.mrb[0].mxu0
    %v742 = vpop.f32.mrb[0].mxu0
    %v743 = vadd.f32 0.0, %v742
    %v744 = vpop.f32.mrb[0].mxu0
    %745 = vdwg.mxu0
    %v762 = vunpack.c.l.b16 %v569
    %v763 = vunpack.c.l.b16 %v570
    %v764 = vunpack.c.l.b16 %v571
    %v765 = vunpack.c.l.b16 %v572
    %v766 = vunpack.c.l.b16 %v573
    %v767 = vunpack.c.l.b16 %v574
    %v768 = vunpack.c.l.b16 %v575
    %v769 = vunpack.c.l.b16 %v576
    %v770 = vunpack.c.l.b16 %v577
    %v771 = vunpack.c.l.b16 %v578
    %v772 = vunpack.c.l.b16 %v579
    %v773 = vunpack.c.l.b16 %v580
    %v774 = vunpack.c.l.b16 %v581
    %v775 = vunpack.c.l.b16 %v582
    %v776 = vunpack.c.l.b16 %v583
    %v777 = vunpack.c.l.b16 %v584
    %v778 = vpack.c.b16 %v763, %v762
    %v779 = vpack.c.b16 %v765, %v764
    %v780 = vpack.c.b16 %v767, %v766
    %v781 = vpack.c.b16 %v769, %v768
    %v782 = vpack.c.b16 %v771, %v770
    %v783 = vpack.c.b16 %v773, %v772
    %v784 = vpack.c.b16 %v775, %v774
    %v785 = vpack.c.b16 %v777, %v776
    %794 = vmatprep.subr.bf16.mxu0 0
    %795 = vmatpush1.bf16.msra.mxu0 %v778
    %796 = vmatprep.subr.bf16.mxu0 0
    %797 = vmatpush1.bf16.msra.mxu0 %v779
    %798 = vmatprep.subr.bf16.mxu0 0
    %799 = vmatpush1.bf16.msra.mxu0 %v780
    %800 = vmatprep.subr.bf16.mxu0 0
    %801 = vmatpush1.bf16.msra.mxu0 %v781
    %802 = vmatprep.subr.bf16.mxu0 0
    %803 = vmatpush1.bf16.msra.mxu0 %v782
    %804 = vmatprep.subr.bf16.mxu0 0
    %805 = vmatpush1.bf16.msra.mxu0 %v783
    %806 = vmatprep.subr.bf16.mxu0 0
    %807 = vmatpush1.bf16.msra.mxu0 %v784
    %808 = vmatprep.subr.bf16.mxu0 0
    %809 = vmatpush1.bf16.msra.mxu0 %v785
    %810 = vmatprep.subr.bf16.mxu0 0
    %811 = vmatpush1.bf16.msra.mxu0 0
    %812 = vmatprep.subr.bf16.mxu0 0
    %813 = vmatpush1.bf16.msra.mxu0 0
    %814 = vmatprep.subr.bf16.mxu0 0
    %815 = vmatpush1.bf16.msra.mxu0 0
    %816 = vmatprep.subr.bf16.mxu0 0
    %817 = vmatpush1.bf16.msra.mxu0 0
    %818 = vmatprep.subr.bf16.mxu0 0
    %819 = vmatpush1.bf16.msra.mxu0 0
    %820 = vmatprep.subr.bf16.mxu0 0
    %821 = vmatpush1.bf16.msra.mxu0 0
    %822 = vmatprep.subr.bf16.mxu0 0
    %823 = vmatpush1.bf16.msra.mxu0 0
    %824 = vmatprep.subr.bf16.mxu0 0
    %825 = vmatpush1.bf16.msra.mxu0 0
    %826 = vmatprep.mubr.bf16.mxu0 0
    %827 = vmatmul.mubr.bf16.gmra.mrb[0].mxu0 %v561
    %v828 = vpop.f32.mrb[0].mxu0
    %v829 = vadd.f32 %v684, %v828
    %v830 = vpop.f32.mrb[0].mxu0
    %v831 = vpop.f32.mrb[0].mxu0
    %v832 = vadd.f32 %v687, %v831
    %v833 = vpop.f32.mrb[0].mxu0
    %834 = vmatprep.mubr.bf16.mxu0 0
    %835 = vmatmul.mubr.bf16.gmra.mrb[0].mxu0 %v562
    %v836 = vpop.f32.mrb[0].mxu0
    %v837 = vadd.f32 %v692, %v836
    %v838 = vpop.f32.mrb[0].mxu0
    %v839 = vpop.f32.mrb[0].mxu0
    %v840 = vadd.f32 %v695, %v839
    %v841 = vpop.f32.mrb[0].mxu0
    %842 = vmatprep.mubr.bf16.mxu0 0
    %843 = vmatmul.mubr.bf16.gmra.mrb[0].mxu0 %v563
    %v844 = vpop.f32.mrb[0].mxu0
    %v845 = vadd.f32 %v700, %v844
    %v846 = vpop.f32.mrb[0].mxu0
    %v847 = vpop.f32.mrb[0].mxu0
    %v848 = vadd.f32 %v703, %v847
    %v849 = vpop.f32.mrb[0].mxu0
    %850 = vmatprep.mubr.bf16.mxu0 0
    %851 = vmatmul.mubr.bf16.gmra.mrb[0].mxu0 %v564
    %v852 = vpop.f32.mrb[0].mxu0
    %v853 = vadd.f32 %v708, %v852
    %v854 = vpop.f32.mrb[0].mxu0
    %v855 = vpop.f32.mrb[0].mxu0
    %v856 = vadd.f32 %v711, %v855
    %v857 = vpop.f32.mrb[0].mxu0
    %858 = vmatprep.mubr.bf16.mxu0 0
    %859 = vmatmul.mubr.bf16.gmra.mrb[0].mxu0 %v565
    %v860 = vpop.f32.mrb[0].mxu0
    %v861 = vadd.f32 %v716, %v860
    %v862 = vpop.f32.mrb[0].mxu0
    %v863 = vpop.f32.mrb[0].mxu0
    %v864 = vadd.f32 %v719, %v863
    %v865 = vpop.f32.mrb[0].mxu0
    %866 = vmatprep.mubr.bf16.mxu0 0
    %867 = vmatmul.mubr.bf16.gmra.mrb[0].mxu0 %v566
    %v868 = vpop.f32.mrb[0].mxu0
    %v869 = vadd.f32 %v724, %v868
    %v870 = vpop.f32.mrb[0].mxu0
    %v871 = vpop.f32.mrb[0].mxu0
    %v872 = vadd.f32 %v727, %v871
    %v873 = vpop.f32.mrb[0].mxu0
    %874 = vmatprep.mubr.bf16.mxu0 0
    %875 = vmatmul.mubr.bf16.gmra.mrb[0].mxu0 %v567
    %v876 = vpop.f32.mrb[0].mxu0
    %v877 = vadd.f32 %v732, %v876
    %v878 = vpop.f32.mrb[0].mxu0
    %v879 = vpop.f32.mrb[0].mxu0
    %v880 = vadd.f32 %v735, %v879
    %v881 = vpop.f32.mrb[0].mxu0
    %882 = vmatprep.mubr.bf16.mxu0 0
    %883 = vmatmul.mubr.bf16.gmra.mrb[0].mxu0 %v568
    %v884 = vpop.f32.mrb[0].mxu0
    %v885 = vadd.f32 %v740, %v884
    %v886 = vpop.f32.mrb[0].mxu0
    %v887 = vpop.f32.mrb[0].mxu0
    %v888 = vadd.f32 %v743, %v887
    %v889 = vpop.f32.mrb[0].mxu0
    %890 = vdwg.mxu0
    %v891 = vld [vmem:[%s6] sm:$0x1]
    %v893 = vlaneseq
    %v894 = vshrl.u32 %v893, 7
    %v895 = vsub.s32 0, %v894
    %v896 = vrot.slane %v891, %v895
    %v898 = vadd.f32 %v829, %v896
    %v899 = vadd.f32 %v832, %v896
    %v900 = vadd.f32 %v837, %v896
    %v901 = vadd.f32 %v840, %v896
    %v902 = vadd.f32 %v845, %v896
    %v903 = vadd.f32 %v848, %v896
    %v904 = vadd.f32 %v853, %v896
    %v905 = vadd.f32 %v856, %v896
    %v906 = vadd.f32 %v861, %v896
    %v907 = vadd.f32 %v864, %v896
    %v908 = vadd.f32 %v869, %v896
    %v909 = vadd.f32 %v872, %v896
    %v910 = vadd.f32 %v877, %v896
    %v911 = vadd.f32 %v880, %v896
    %v912 = vadd.f32 %v885, %v896
    %v913 = vadd.f32 %v888, %v896
    %v914 = vmax.f32 %v898, 0.0
    %v915 = vmax.f32 %v899, 0.0
    %v916 = vmax.f32 %v900, 0.0
    %v917 = vmax.f32 %v901, 0.0
    %v918 = vmax.f32 %v902, 0.0
    %v919 = vmax.f32 %v903, 0.0
    %v920 = vmax.f32 %v904, 0.0
    %v921 = vmax.f32 %v905, 0.0
    %v922 = vmax.f32 %v906, 0.0
    %v923 = vmax.f32 %v907, 0.0
    %v924 = vmax.f32 %v908, 0.0
    %v925 = vmax.f32 %v909, 0.0
    %v926 = vmax.f32 %v910, 0.0
    %v927 = vmax.f32 %v911, 0.0
    %v928 = vmax.f32 %v912, 0.0
    %v929 = vmax.f32 %v913, 0.0
    %v930 = vld [vmem:[#allocation3] sm:$0xff]
    %v931 = vld [vmem:[#allocation3 + $0x8] sm:$0xff]
    %v932 = vld [vmem:[#allocation3 + $0x10] sm:$0xff]
    %v933 = vld [vmem:[#allocation3 + $0x18] sm:$0xff]
    %v934 = vld [vmem:[#allocation3 + $0x20] sm:$0xff]
    %v935 = vld [vmem:[#allocation3 + $0x28] sm:$0xff]
    %v936 = vld [vmem:[#allocation3 + $0x30] sm:$0xff]
    %v937 = vld [vmem:[#allocation3 + $0x38] sm:$0xff]
    %v938 = vunpack.c.l.bf16 %v930
    %v939 = vunpack.c.h.bf16 %v930
    %v940 = vunpack.c.l.bf16 %v931
    %v941 = vunpack.c.h.bf16 %v931
    %v942 = vunpack.c.l.bf16 %v932
    %v943 = vunpack.c.h.bf16 %v932
    %v944 = vunpack.c.l.bf16 %v933
    %v945 = vunpack.c.h.bf16 %v933
    %v946 = vunpack.c.l.bf16 %v934
    %v947 = vunpack.c.h.bf16 %v934
    %v948 = vunpack.c.l.bf16 %v935
    %v949 = vunpack.c.h.bf16 %v935
    %v950 = vunpack.c.l.bf16 %v936
    %v951 = vunpack.c.h.bf16 %v936
    %v952 = vunpack.c.l.bf16 %v937
    %v953 = vunpack.c.h.bf16 %v937
    %v954 = vadd.f32 %v914, %v938
    %v955 = vadd.f32 %v915, %v939
    %v956 = vadd.f32 %v916, %v940
    %v957 = vadd.f32 %v917, %v941
    %v958 = vadd.f32 %v918, %v942
    %v959 = vadd.f32 %v919, %v943
    %v960 = vadd.f32 %v920, %v944
    %v961 = vadd.f32 %v921, %v945
    %v962 = vadd.f32 %v922, %v946
    %v963 = vadd.f32 %v923, %v947
    %v964 = vadd.f32 %v924, %v948
    %v965 = vadd.f32 %v925, %v949
    %v966 = vadd.f32 %v926, %v950
    %v967 = vadd.f32 %v927, %v951
    %v968 = vadd.f32 %v928, %v952
    %v969 = vadd.f32 %v929, %v953
    %v970 = vpack.c.bf16 %v955, %v954
    %v971 = vpack.c.bf16 %v957, %v956
    %v972 = vpack.c.bf16 %v959, %v958
    %v973 = vpack.c.bf16 %v961, %v960
    %v974 = vpack.c.bf16 %v963, %v962
    %v975 = vpack.c.bf16 %v965, %v964
    %v976 = vpack.c.bf16 %v967, %v966
    %v977 = vpack.c.bf16 %v969, %v968
    %978 = vst [vmem:[#allocation2] sm:$0xff] %v970
    %979 = vst [vmem:[#allocation2 + $0x8] sm:$0xff] %v971
    %980 = vst [vmem:[#allocation2 + $0x10] sm:$0xff] %v972
    %981 = vst [vmem:[#allocation2 + $0x18] sm:$0xff] %v973
    %982 = vst [vmem:[#allocation2 + $0x20] sm:$0xff] %v974
    %983 = vst [vmem:[#allocation2 + $0x28] sm:$0xff] %v975
    %984 = vst [vmem:[#allocation2 + $0x30] sm:$0xff] %v976
    %985 = vst [vmem:[#allocation2 + $0x38] sm:$0xff] %v977
    %v986 = vld [vmem:[#allocation2] sm:$0xff]
    %v987 = vld [vmem:[#allocation2 + $0x8] sm:$0xff]
    %v988 = vld [vmem:[#allocation2 + $0x10] sm:$0xff]
    %v989 = vld [vmem:[#allocation2 + $0x18] sm:$0xff]
    %v990 = vld [vmem:[#allocation2 + $0x20] sm:$0xff]
    %v991 = vld [vmem:[#allocation2 + $0x28] sm:$0xff]
    %v992 = vld [vmem:[#allocation2 + $0x30] sm:$0xff]
    %v993 = vld [vmem:[#allocation2 + $0x38] sm:$0xff]
    %994 = vmatprep.subr.bf16.mxu0 0
    %995 = vmatpush1.bf16.msra.mxu0 %v986
    %996 = vmatprep.subr.bf16.mxu0 0
    %997 = vmatpush1.bf16.msra.mxu0 %v987
    %998 = vmatprep.subr.bf16.mxu0 0
    %999 = vmatpush1.bf16.msra.mxu0 %v988
    %1000 = vmatprep.subr.bf16.mxu0 0
    %1001 = vmatpush1.bf16.msra.mxu0 %v989
    %1002 = vmatprep.subr.bf16.mxu0 0
    %1003 = vmatpush1.bf16.msra.mxu0 %v990
    %1004 = vmatprep.subr.bf16.mxu0 0
    %1005 = vmatpush1.bf16.msra.mxu0 %v991
    %1006 = vmatprep.subr.bf16.mxu0 0
    %1007 = vmatpush1.bf16.msra.mxu0 %v992
    %1008 = vmatprep.subr.bf16.mxu0 0
    %1009 = vmatpush1.bf16.msra.mxu0 %v993
    %1010 = vmatprep.subr.bf16.mxu0 0
    %1011 = vmatpush1.bf16.msra.mxu0 0
    %1012 = vmatprep.subr.bf16.mxu0 0
    %1013 = vmatpush1.bf16.msra.mxu0 0
    %1014 = vmatprep.subr.bf16.mxu0 0
    %1015 = vmatpush1.bf16.msra.mxu0 0
    %1016 = vmatprep.subr.bf16.mxu0 0
    %1017 = vmatpush1.bf16.msra.mxu0 0
    %1018 = vmatprep.subr.bf16.mxu0 0
    %1019 = vmatpush1.bf16.msra.mxu0 0
    %1020 = vmatprep.subr.bf16.mxu0 0
    %1021 = vmatpush1.bf16.msra.mxu0 0
    %1022 = vmatprep.subr.bf16.mxu0 0
    %1023 = vmatpush1.bf16.msra.mxu0 0
    %1024 = vmatprep.subr.bf16.mxu0 0
    %1025 = vmatpush1.bf16.msra.mxu0 0
    %1026 = vmatprep.mubr.bf16.mxu0 0
    %1027 = vmatmul.mubr.bf16.gmra.mrb[0].mxu0 %v448
    %v1028 = vpop.f32.mrb[0].mxu0
    %v1029 = vadd.f32 0.0, %v1028
    %v1030 = vpop.f32.mrb[0].mxu0
    %v1031 = vpop.f32.mrb[0].mxu0
    %v1032 = vadd.f32 0.0, %v1031
    %v1033 = vpop.f32.mrb[0].mxu0
    %1034 = vmatprep.mubr.bf16.mxu0 0
    %1035 = vmatmul.mubr.bf16.gmra.mrb[0].mxu0 %v449
    %v1036 = vpop.f32.mrb[0].mxu0
    %v1037 = vadd.f32 0.0, %v1036
    %v1038 = vpop.f32.mrb[0].mxu0
    %v1039 = vpop.f32.mrb[0].mxu0
    %v1040 = vadd.f32 0.0, %v1039
    %v1041 = vpop.f32.mrb[0].mxu0
    %1042 = vmatprep.mubr.bf16.mxu0 0
    %1043 = vmatmul.mubr.bf16.gmra.mrb[0].mxu0 %v450
    %v1044 = vpop.f32.mrb[0].mxu0
    %v1045 = vadd.f32 0.0, %v1044
    %v1046 = vpop.f32.mrb[0].mxu0
    %v1047 = vpop.f32.mrb[0].mxu0
    %v1048 = vadd.f32 0.0, %v1047
    %v1049 = vpop.f32.mrb[0].mxu0
    %1050 = vmatprep.mubr.bf16.mxu0 0
    %1051 = vmatmul.mubr.bf16.gmra.mrb[0].mxu0 %v451
    %v1052 = vpop.f32.mrb[0].mxu0
    %v1053 = vadd.f32 0.0, %v1052
    %v1054 = vpop.f32.mrb[0].mxu0
    %v1055 = vpop.f32.mrb[0].mxu0
    %v1056 = vadd.f32 0.0, %v1055
    %v1057 = vpop.f32.mrb[0].mxu0
    %1058 = vmatprep.mubr.bf16.mxu0 0
    %1059 = vmatmul.mubr.bf16.gmra.mrb[0].mxu0 %v452
    %v1060 = vpop.f32.mrb[0].mxu0
    %v1061 = vadd.f32 0.0, %v1060
    %v1062 = vpop.f32.mrb[0].mxu0
    %v1063 = vpop.f32.mrb[0].mxu0
    %v1064 = vadd.f32 0.0, %v1063
    %v1065 = vpop.f32.mrb[0].mxu0
    %1066 = vmatprep.mubr.bf16.mxu0 0
    %1067 = vmatmul.mubr.bf16.gmra.mrb[0].mxu0 %v453
    %v1068 = vpop.f32.mrb[0].mxu0
    %v1069 = vadd.f32 0.0, %v1068
    %v1070 = vpop.f32.mrb[0].mxu0
    %v1071 = vpop.f32.mrb[0].mxu0
    %v1072 = vadd.f32 0.0, %v1071
    %v1073 = vpop.f32.mrb[0].mxu0
    %1074 = vmatprep.mubr.bf16.mxu0 0
    %1075 = vmatmul.mubr.bf16.gmra.mrb[0].mxu0 %v454
    %v1076 = vpop.f32.mrb[0].mxu0
    %v1077 = vadd.f32 0.0, %v1076
    %v1078 = vpop.f32.mrb[0].mxu0
    %v1079 = vpop.f32.mrb[0].mxu0
    %v1080 = vadd.f32 0.0, %v1079
    %v1081 = vpop.f32.mrb[0].mxu0
    %1082 = vmatprep.mubr.bf16.mxu0 0
    %1083 = vmatmul.mubr.bf16.gmra.mrb[0].mxu0 %v455
    %v1084 = vpop.f32.mrb[0].mxu0
    %v1085 = vadd.f32 0.0, %v1084
    %v1086 = vpop.f32.mrb[0].mxu0
    %v1087 = vpop.f32.mrb[0].mxu0
    %v1088 = vadd.f32 0.0, %v1087
    %v1089 = vpop.f32.mrb[0].mxu0
    %1090 = vdwg.mxu0
    %v1091 = vpack.c.bf16 %v1032, %v1029
    %v1092 = vpack.c.bf16 %v1040, %v1037
    %v1093 = vpack.c.bf16 %v1048, %v1045
    %v1094 = vpack.c.bf16 %v1056, %v1053
    %v1095 = vpack.c.bf16 %v1064, %v1061
    %v1096 = vpack.c.bf16 %v1072, %v1069
    %v1097 = vpack.c.bf16 %v1080, %v1077
    %v1098 = vpack.c.bf16 %v1088, %v1085
    %s1099 = scalar_lea.vmem [#allocation10], 64
    %v1100 = vld [vmem:[%s1099] sm:$0xf]
    %v1101 = vld [vmem:[%s1099 + $0x4] sm:$0xf]
    %v1102 = vld [vmem:[%s1099 + $0x8] sm:$0xf]
    %v1103 = vld [vmem:[%s1099 + $0xc] sm:$0xf]
    %v1104 = vld [vmem:[%s1099 + $0x10] sm:$0xf]
    %v1105 = vld [vmem:[%s1099 + $0x14] sm:$0xf]
    %v1106 = vld [vmem:[%s1099 + $0x18] sm:$0xf]
    %v1107 = vld [vmem:[%s1099 + $0x1c] sm:$0xf]
    %v1108 = vld [vmem:[%s1099 + $0x20] sm:$0xf]
    %v1109 = vld [vmem:[%s1099 + $0x24] sm:$0xf]
    %v1110 = vld [vmem:[%s1099 + $0x28] sm:$0xf]
    %v1111 = vld [vmem:[%s1099 + $0x2c] sm:$0xf]
    %v1112 = vld [vmem:[%s1099 + $0x30] sm:$0xf]
    %v1113 = vld [vmem:[%s1099 + $0x34] sm:$0xf]
    %v1114 = vld [vmem:[%s1099 + $0x38] sm:$0xf]
    %v1115 = vld [vmem:[%s1099 + $0x3c] sm:$0xf]
    %s1116 = scalar_lea.vmem [#allocation12], 64
    %v1117 = vld [vmem:[%s1116] sm:$0xf]
    %v1118 = vld [vmem:[%s1116 + $0x4] sm:$0xf]
    %v1119 = vld [vmem:[%s1116 + $0x8] sm:$0xf]
    %v1120 = vld [vmem:[%s1116 + $0xc] sm:$0xf]
    %v1121 = vld [vmem:[%s1116 + $0x10] sm:$0xf]
    %v1122 = vld [vmem:[%s1116 + $0x14] sm:$0xf]
    %v1123 = vld [vmem:[%s1116 + $0x18] sm:$0xf]
    %v1124 = vld [vmem:[%s1116 + $0x1c] sm:$0xf]
    %v1125 = vld [vmem:[%s1116 + $0x20] sm:$0xf]
    %v1126 = vld [vmem:[%s1116 + $0x24] sm:$0xf]
    %v1127 = vld [vmem:[%s1116 + $0x28] sm:$0xf]
    %v1128 = vld [vmem:[%s1116 + $0x2c] sm:$0xf]
    %v1129 = vld [vmem:[%s1116 + $0x30] sm:$0xf]
    %v1130 = vld [vmem:[%s1116 + $0x34] sm:$0xf]
    %v1131 = vld [vmem:[%s1116 + $0x38] sm:$0xf]
    %v1132 = vld [vmem:[%s1116 + $0x3c] sm:$0xf]
    %v1149 = vunpack.c.l.b16 %v1117
    %v1150 = vunpack.c.l.b16 %v1118
    %v1151 = vunpack.c.l.b16 %v1119
    %v1152 = vunpack.c.l.b16 %v1120
    %v1153 = vunpack.c.l.b16 %v1121
    %v1154 = vunpack.c.l.b16 %v1122
    %v1155 = vunpack.c.l.b16 %v1123
    %v1156 = vunpack.c.l.b16 %v1124
    %v1157 = vunpack.c.l.b16 %v1125
    %v1158 = vunpack.c.l.b16 %v1126
    %v1159 = vunpack.c.l.b16 %v1127
    %v1160 = vunpack.c.l.b16 %v1128
    %v1161 = vunpack.c.l.b16 %v1129
    %v1162 = vunpack.c.l.b16 %v1130
    %v1163 = vunpack.c.l.b16 %v1131
    %v1164 = vunpack.c.l.b16 %v1132
    %v1165 = vpack.c.b16 %v1150, %v1149
    %v1166 = vpack.c.b16 %v1152, %v1151
    %v1167 = vpack.c.b16 %v1154, %v1153
    %v1168 = vpack.c.b16 %v1156, %v1155
    %v1169 = vpack.c.b16 %v1158, %v1157
    %v1170 = vpack.c.b16 %v1160, %v1159
    %v1171 = vpack.c.b16 %v1162, %v1161
    %v1172 = vpack.c.b16 %v1164, %v1163
    %1181 = vmatprep.subr.bf16.mxu0 0
    %1182 = vmatpush1.bf16.msra.mxu0 %v1165
    %1183 = vmatprep.subr.bf16.mxu0 0
    %1184 = vmatpush1.bf16.msra.mxu0 %v1166
    %1185 = vmatprep.subr.bf16.mxu0 0
    %1186 = vmatpush1.bf16.msra.mxu0 %v1167
    %1187 = vmatprep.subr.bf16.mxu0 0
    %1188 = vmatpush1.bf16.msra.mxu0 %v1168
    %1189 = vmatprep.subr.bf16.mxu0 0
    %1190 = vmatpush1.bf16.msra.mxu0 %v1169
    %1191 = vmatprep.subr.bf16.mxu0 0
    %1192 = vmatpush1.bf16.msra.mxu0 %v1170
    %1193 = vmatprep.subr.bf16.mxu0 0
    %1194 = vmatpush1.bf16.msra.mxu0 %v1171
    %1195 = vmatprep.subr.bf16.mxu0 0
    %1196 = vmatpush1.bf16.msra.mxu0 %v1172
    %1197 = vmatprep.subr.bf16.mxu0 0
    %1198 = vmatpush1.bf16.msra.mxu0 0
    %1199 = vmatprep.subr.bf16.mxu0 0
    %1200 = vmatpush1.bf16.msra.mxu0 0
    %1201 = vmatprep.subr.bf16.mxu0 0
    %1202 = vmatpush1.bf16.msra.mxu0 0
    %1203 = vmatprep.subr.bf16.mxu0 0
    %1204 = vmatpush1.bf16.msra.mxu0 0
    %1205 = vmatprep.subr.bf16.mxu0 0
    %1206 = vmatpush1.bf16.msra.mxu0 0
    %1207 = vmatprep.subr.bf16.mxu0 0
    %1208 = vmatpush1.bf16.msra.mxu0 0
    %1209 = vmatprep.subr.bf16.mxu0 0
    %1210 = vmatpush1.bf16.msra.mxu0 0
    %1211 = vmatprep.subr.bf16.mxu0 0
    %1212 = vmatpush1.bf16.msra.mxu0 0
    %1213 = vmatprep.mubr.bf16.mxu0 0
    %1214 = vmatmul.mubr.bf16.gmra.mrb[0].mxu0 %v986
    %v1215 = vpop.f32.mrb[0].mxu0
    %v1216 = vadd.f32 0.0, %v1215
    %v1217 = vpop.f32.mrb[0].mxu0
    %v1218 = vpop.f32.mrb[0].mxu0
    %v1219 = vadd.f32 0.0, %v1218
    %v1220 = vpop.f32.mrb[0].mxu0
    %1221 = vmatprep.mubr.bf16.mxu0 0
    %1222 = vmatmul.mubr.bf16.gmra.mrb[0].mxu0 %v987
    %v1223 = vpop.f32.mrb[0].mxu0
    %v1224 = vadd.f32 0.0, %v1223
    %v1225 = vpop.f32.mrb[0].mxu0
    %v1226 = vpop.f32.mrb[0].mxu0
    %v1227 = vadd.f32 0.0, %v1226
    %v1228 = vpop.f32.mrb[0].mxu0
    %1229 = vmatprep.mubr.bf16.mxu0 0
    %1230 = vmatmul.mubr.bf16.gmra.mrb[0].mxu0 %v988
    %v1231 = vpop.f32.mrb[0].mxu0
    %v1232 = vadd.f32 0.0, %v1231
    %v1233 = vpop.f32.mrb[0].mxu0
    %v1234 = vpop.f32.mrb[0].mxu0
    %v1235 = vadd.f32 0.0, %v1234
    %v1236 = vpop.f32.mrb[0].mxu0
    %1237 = vmatprep.mubr.bf16.mxu0 0
    %1238 = vmatmul.mubr.bf16.gmra.mrb[0].mxu0 %v989
    %v1239 = vpop.f32.mrb[0].mxu0
    %v1240 = vadd.f32 0.0, %v1239
    %v1241 = vpop.f32.mrb[0].mxu0
    %v1242 = vpop.f32.mrb[0].mxu0
    %v1243 = vadd.f32 0.0, %v1242
    %v1244 = vpop.f32.mrb[0].mxu0
    %1245 = vmatprep.mubr.bf16.mxu0 0
    %1246 = vmatmul.mubr.bf16.gmra.mrb[0].mxu0 %v990
    %v1247 = vpop.f32.mrb[0].mxu0
    %v1248 = vadd.f32 0.0, %v1247
    %v1249 = vpop.f32.mrb[0].mxu0
    %v1250 = vpop.f32.mrb[0].mxu0
    %v1251 = vadd.f32 0.0, %v1250
    %v1252 = vpop.f32.mrb[0].mxu0
    %1253 = vmatprep.mubr.bf16.mxu0 0
    %1254 = vmatmul.mubr.bf16.gmra.mrb[0].mxu0 %v991
    %v1255 = vpop.f32.mrb[0].mxu0
    %v1256 = vadd.f32 0.0, %v1255
    %v1257 = vpop.f32.mrb[0].mxu0
    %v1258 = vpop.f32.mrb[0].mxu0
    %v1259 = vadd.f32 0.0, %v1258
    %v1260 = vpop.f32.mrb[0].mxu0
    %1261 = vmatprep.mubr.bf16.mxu0 0
    %1262 = vmatmul.mubr.bf16.gmra.mrb[0].mxu0 %v992
    %v1263 = vpop.f32.mrb[0].mxu0
    %v1264 = vadd.f32 0.0, %v1263
    %v1265 = vpop.f32.mrb[0].mxu0
    %v1266 = vpop.f32.mrb[0].mxu0
    %v1267 = vadd.f32 0.0, %v1266
    %v1268 = vpop.f32.mrb[0].mxu0
    %1269 = vmatprep.mubr.bf16.mxu0 0
    %1270 = vmatmul.mubr.bf16.gmra.mrb[0].mxu0 %v993
    %v1271 = vpop.f32.mrb[0].mxu0
    %v1272 = vadd.f32 0.0, %v1271
    %v1273 = vpop.f32.mrb[0].mxu0
    %v1274 = vpop.f32.mrb[0].mxu0
    %v1275 = vadd.f32 0.0, %v1274
    %v1276 = vpop.f32.mrb[0].mxu0
    %1277 = vdwg.mxu0
    %v1294 = vunpack.c.l.b16 %v1100
    %v1295 = vunpack.c.l.b16 %v1101
    %v1296 = vunpack.c.l.b16 %v1102
    %v1297 = vunpack.c.l.b16 %v1103
    %v1298 = vunpack.c.l.b16 %v1104
    %v1299 = vunpack.c.l.b16 %v1105
    %v1300 = vunpack.c.l.b16 %v1106
    %v1301 = vunpack.c.l.b16 %v1107
    %v1302 = vunpack.c.l.b16 %v1108
    %v1303 = vunpack.c.l.b16 %v1109
    %v1304 = vunpack.c.l.b16 %v1110
    %v1305 = vunpack.c.l.b16 %v1111
    %v1306 = vunpack.c.l.b16 %v1112
    %v1307 = vunpack.c.l.b16 %v1113
    %v1308 = vunpack.c.l.b16 %v1114
    %v1309 = vunpack.c.l.b16 %v1115
    %v1310 = vpack.c.b16 %v1295, %v1294
    %v1311 = vpack.c.b16 %v1297, %v1296
    %v1312 = vpack.c.b16 %v1299, %v1298
    %v1313 = vpack.c.b16 %v1301, %v1300
    %v1314 = vpack.c.b16 %v1303, %v1302
    %v1315 = vpack.c.b16 %v1305, %v1304
    %v1316 = vpack.c.b16 %v1307, %v1306
    %v1317 = vpack.c.b16 %v1309, %v1308
    %1326 = vmatprep.subr.bf16.mxu0 0
    %1327 = vmatpush1.bf16.msra.mxu0 %v1310
    %1328 = vmatprep.subr.bf16.mxu0 0
    %1329 = vmatpush1.bf16.msra.mxu0 %v1311
    %1330 = vmatprep.subr.bf16.mxu0 0
    %1331 = vmatpush1.bf16.msra.mxu0 %v1312
    %1332 = vmatprep.subr.bf16.mxu0 0
    %1333 = vmatpush1.bf16.msra.mxu0 %v1313
    %1334 = vmatprep.subr.bf16.mxu0 0
    %1335 = vmatpush1.bf16.msra.mxu0 %v1314
    %1336 = vmatprep.subr.bf16.mxu0 0
    %1337 = vmatpush1.bf16.msra.mxu0 %v1315
    %1338 = vmatprep.subr.bf16.mxu0 0
    %1339 = vmatpush1.bf16.msra.mxu0 %v1316
    %1340 = vmatprep.subr.bf16.mxu0 0
    %1341 = vmatpush1.bf16.msra.mxu0 %v1317
    %1342 = vmatprep.subr.bf16.mxu0 0
    %1343 = vmatpush1.bf16.msra.mxu0 0
    %1344 = vmatprep.subr.bf16.mxu0 0
    %1345 = vmatpush1.bf16.msra.mxu0 0
    %1346 = vmatprep.subr.bf16.mxu0 0
    %1347 = vmatpush1.bf16.msra.mxu0 0
    %1348 = vmatprep.subr.bf16.mxu0 0
    %1349 = vmatpush1.bf16.msra.mxu0 0
    %1350 = vmatprep.subr.bf16.mxu0 0
    %1351 = vmatpush1.bf16.msra.mxu0 0
    %1352 = vmatprep.subr.bf16.mxu0 0
    %1353 = vmatpush1.bf16.msra.mxu0 0
    %1354 = vmatprep.subr.bf16.mxu0 0
    %1355 = vmatpush1.bf16.msra.mxu0 0
    %1356 = vmatprep.subr.bf16.mxu0 0
    %1357 = vmatpush1.bf16.msra.mxu0 0
    %1358 = vmatprep.mubr.bf16.mxu0 0
    %1359 = vmatmul.mubr.bf16.gmra.mrb[0].mxu0 %v1091
    %v1360 = vpop.f32.mrb[0].mxu0
    %v1361 = vadd.f32 %v1216, %v1360
    %v1362 = vpop.f32.mrb[0].mxu0
    %v1363 = vpop.f32.mrb[0].mxu0
    %v1364 = vadd.f32 %v1219, %v1363
    %v1365 = vpop.f32.mrb[0].mxu0
    %1366 = vmatprep.mubr.bf16.mxu0 0
    %1367 = vmatmul.mubr.bf16.gmra.mrb[0].mxu0 %v1092
    %v1368 = vpop.f32.mrb[0].mxu0
    %v1369 = vadd.f32 %v1224, %v1368
    %v1370 = vpop.f32.mrb[0].mxu0
    %v1371 = vpop.f32.mrb[0].mxu0
    %v1372 = vadd.f32 %v1227, %v1371
    %v1373 = vpop.f32.mrb[0].mxu0
    %1374 = vmatprep.mubr.bf16.mxu0 0
    %1375 = vmatmul.mubr.bf16.gmra.mrb[0].mxu0 %v1093
    %v1376 = vpop.f32.mrb[0].mxu0
    %v1377 = vadd.f32 %v1232, %v1376
    %v1378 = vpop.f32.mrb[0].mxu0
    %v1379 = vpop.f32.mrb[0].mxu0
    %v1380 = vadd.f32 %v1235, %v1379
    %v1381 = vpop.f32.mrb[0].mxu0
    %1382 = vmatprep.mubr.bf16.mxu0 0
    %1383 = vmatmul.mubr.bf16.gmra.mrb[0].mxu0 %v1094
    %v1384 = vpop.f32.mrb[0].mxu0
    %v1385 = vadd.f32 %v1240, %v1384
    %v1386 = vpop.f32.mrb[0].mxu0
    %v1387 = vpop.f32.mrb[0].mxu0
    %v1388 = vadd.f32 %v1243, %v1387
    %v1389 = vpop.f32.mrb[0].mxu0
    %1390 = vmatprep.mubr.bf16.mxu0 0
    %1391 = vmatmul.mubr.bf16.gmra.mrb[0].mxu0 %v1095
    %v1392 = vpop.f32.mrb[0].mxu0
    %v1393 = vadd.f32 %v1248, %v1392
    %v1394 = vpop.f32.mrb[0].mxu0
    %v1395 = vpop.f32.mrb[0].mxu0
    %v1396 = vadd.f32 %v1251, %v1395
    %v1397 = vpop.f32.mrb[0].mxu0
    %1398 = vmatprep.mubr.bf16.mxu0 0
    %1399 = vmatmul.mubr.bf16.gmra.mrb[0].mxu0 %v1096
    %v1400 = vpop.f32.mrb[0].mxu0
    %v1401 = vadd.f32 %v1256, %v1400
    %v1402 = vpop.f32.mrb[0].mxu0
    %v1403 = vpop.f32.mrb[0].mxu0
    %v1404 = vadd.f32 %v1259, %v1403
    %v1405 = vpop.f32.mrb[0].mxu0
    %1406 = vmatprep.mubr.bf16.mxu0 0
    %1407 = vmatmul.mubr.bf16.gmra.mrb[0].mxu0 %v1097
    %v1408 = vpop.f32.mrb[0].mxu0
    %v1409 = vadd.f32 %v1264, %v1408
    %v1410 = vpop.f32.mrb[0].mxu0
    %v1411 = vpop.f32.mrb[0].mxu0
    %v1412 = vadd.f32 %v1267, %v1411
    %v1413 = vpop.f32.mrb[0].mxu0
    %1414 = vmatprep.mubr.bf16.mxu0 0
    %1415 = vmatmul.mubr.bf16.gmra.mrb[0].mxu0 %v1098
    %v1416 = vpop.f32.mrb[0].mxu0
    %v1417 = vadd.f32 %v1272, %v1416
    %v1418 = vpop.f32.mrb[0].mxu0
    %v1419 = vpop.f32.mrb[0].mxu0
    %v1420 = vadd.f32 %v1275, %v1419
    %v1421 = vpop.f32.mrb[0].mxu0
    %1422 = vdwg.mxu0
    %s1423 = scalar_lea.vmem %s6, 1
    %v1424 = vld [vmem:[%s1423] sm:$0x1]
    %v1426 = vlaneseq
    %v1427 = vshrl.u32 %v1426, 7
    %v1428 = vsub.s32 0, %v1427
    %v1429 = vrot.slane %v1424, %v1428
    %v1431 = vadd.f32 %v1361, %v1429
    %v1432 = vadd.f32 %v1364, %v1429
    %v1433 = vadd.f32 %v1369, %v1429
    %v1434 = vadd.f32 %v1372, %v1429
    %v1435 = vadd.f32 %v1377, %v1429
    %v1436 = vadd.f32 %v1380, %v1429
    %v1437 = vadd.f32 %v1385, %v1429
    %v1438 = vadd.f32 %v1388, %v1429
    %v1439 = vadd.f32 %v1393, %v1429
    %v1440 = vadd.f32 %v1396, %v1429
    %v1441 = vadd.f32 %v1401, %v1429
    %v1442 = vadd.f32 %v1404, %v1429
    %v1443 = vadd.f32 %v1409, %v1429
    %v1444 = vadd.f32 %v1412, %v1429
    %v1445 = vadd.f32 %v1417, %v1429
    %v1446 = vadd.f32 %v1420, %v1429
    %v1447 = vmax.f32 %v1431, 0.0
    %v1448 = vmax.f32 %v1432, 0.0
    %v1449 = vmax.f32 %v1433, 0.0
    %v1450 = vmax.f32 %v1434, 0.0
    %v1451 = vmax.f32 %v1435, 0.0
    %v1452 = vmax.f32 %v1436, 0.0
    %v1453 = vmax.f32 %v1437, 0.0
    %v1454 = vmax.f32 %v1438, 0.0
    %v1455 = vmax.f32 %v1439, 0.0
    %v1456 = vmax.f32 %v1440, 0.0
    %v1457 = vmax.f32 %v1441, 0.0
    %v1458 = vmax.f32 %v1442, 0.0
    %v1459 = vmax.f32 %v1443, 0.0
    %v1460 = vmax.f32 %v1444, 0.0
    %v1461 = vmax.f32 %v1445, 0.0
    %v1462 = vmax.f32 %v1446, 0.0
    %v1463 = vld [vmem:[#allocation3] sm:$0xff]
    %v1464 = vld [vmem:[#allocation3 + $0x8] sm:$0xff]
    %v1465 = vld [vmem:[#allocation3 + $0x10] sm:$0xff]
    %v1466 = vld [vmem:[#allocation3 + $0x18] sm:$0xff]
    %v1467 = vld [vmem:[#allocation3 + $0x20] sm:$0xff]
    %v1468 = vld [vmem:[#allocation3 + $0x28] sm:$0xff]
    %v1469 = vld [vmem:[#allocation3 + $0x30] sm:$0xff]
    %v1470 = vld [vmem:[#allocation3 + $0x38] sm:$0xff]
    %v1471 = vunpack.c.l.bf16 %v1463
    %v1472 = vunpack.c.h.bf16 %v1463
    %v1473 = vunpack.c.l.bf16 %v1464
    %v1474 = vunpack.c.h.bf16 %v1464
    %v1475 = vunpack.c.l.bf16 %v1465
    %v1476 = vunpack.c.h.bf16 %v1465
    %v1477 = vunpack.c.l.bf16 %v1466
    %v1478 = vunpack.c.h.bf16 %v1466
    %v1479 = vunpack.c.l.bf16 %v1467
    %v1480 = vunpack.c.h.bf16 %v1467
    %v1481 = vunpack.c.l.bf16 %v1468
    %v1482 = vunpack.c.h.bf16 %v1468
    %v1483 = vunpack.c.l.bf16 %v1469
    %v1484 = vunpack.c.h.bf16 %v1469
    %v1485 = vunpack.c.l.bf16 %v1470
    %v1486 = vunpack.c.h.bf16 %v1470
    %v1487 = vadd.f32 %v1447, %v1471
    %v1488 = vadd.f32 %v1448, %v1472
    %v1489 = vadd.f32 %v1449, %v1473
    %v1490 = vadd.f32 %v1450, %v1474
    %v1491 = vadd.f32 %v1451, %v1475
    %v1492 = vadd.f32 %v1452, %v1476
    %v1493 = vadd.f32 %v1453, %v1477
    %v1494 = vadd.f32 %v1454, %v1478
    %v1495 = vadd.f32 %v1455, %v1479
    %v1496 = vadd.f32 %v1456, %v1480
    %v1497 = vadd.f32 %v1457, %v1481
    %v1498 = vadd.f32 %v1458, %v1482
    %v1499 = vadd.f32 %v1459, %v1483
    %v1500 = vadd.f32 %v1460, %v1484
    %v1501 = vadd.f32 %v1461, %v1485
    %v1502 = vadd.f32 %v1462, %v1486
    %v1503 = vpack.c.bf16 %v1488, %v1487
    %v1504 = vpack.c.bf16 %v1490, %v1489
    %v1505 = vpack.c.bf16 %v1492, %v1491
    %v1506 = vpack.c.bf16 %v1494, %v1493
    %v1507 = vpack.c.bf16 %v1496, %v1495
    %v1508 = vpack.c.bf16 %v1498, %v1497
    %v1509 = vpack.c.bf16 %v1500, %v1499
    %v1510 = vpack.c.bf16 %v1502, %v1501
    %1511 = vst [vmem:[#allocation2] sm:$0xff] %v1503
    %1512 = vst [vmem:[#allocation2 + $0x8] sm:$0xff] %v1504
    %1513 = vst [vmem:[#allocation2 + $0x10] sm:$0xff] %v1505
    %1514 = vst [vmem:[#allocation2 + $0x18] sm:$0xff] %v1506
    %1515 = vst [vmem:[#allocation2 + $0x20] sm:$0xff] %v1507
    %1516 = vst [vmem:[#allocation2 + $0x28] sm:$0xff] %v1508
    %1517 = vst [vmem:[#allocation2 + $0x30] sm:$0xff] %v1509
    %1518 = vst [vmem:[#allocation2 + $0x38] sm:$0xff] %v1510
    %v1519 = vld [vmem:[#allocation2] sm:$0xff]
    %v1520 = vld [vmem:[#allocation2 + $0x8] sm:$0xff]
    %v1521 = vld [vmem:[#allocation2 + $0x10] sm:$0xff]
    %v1522 = vld [vmem:[#allocation2 + $0x18] sm:$0xff]
    %v1523 = vld [vmem:[#allocation2 + $0x20] sm:$0xff]
    %v1524 = vld [vmem:[#allocation2 + $0x28] sm:$0xff]
    %v1525 = vld [vmem:[#allocation2 + $0x30] sm:$0xff]
    %v1526 = vld [vmem:[#allocation2 + $0x38] sm:$0xff]
    %1527 = vmatprep.subr.bf16.mxu0 0
    %1528 = vmatpush1.bf16.msra.mxu0 %v1519
    %1529 = vmatprep.subr.bf16.mxu0 0
    %1530 = vmatpush1.bf16.msra.mxu0 %v1520
    %1531 = vmatprep.subr.bf16.mxu0 0
    %1532 = vmatpush1.bf16.msra.mxu0 %v1521
    %1533 = vmatprep.subr.bf16.mxu0 0
    %1534 = vmatpush1.bf16.msra.mxu0 %v1522
    %1535 = vmatprep.subr.bf16.mxu0 0
    %1536 = vmatpush1.bf16.msra.mxu0 %v1523
    %1537 = vmatprep.subr.bf16.mxu0 0
    %1538 = vmatpush1.bf16.msra.mxu0 %v1524
    %1539 = vmatprep.subr.bf16.mxu0 0
    %1540 = vmatpush1.bf16.msra.mxu0 %v1525
    %1541 = vmatprep.subr.bf16.mxu0 0
    %1542 = vmatpush1.bf16.msra.mxu0 %v1526
    %1543 = vmatprep.subr.bf16.mxu0 0
    %1544 = vmatpush1.bf16.msra.mxu0 0
    %1545 = vmatprep.subr.bf16.mxu0 0
    %1546 = vmatpush1.bf16.msra.mxu0 0
    %1547 = vmatprep.subr.bf16.mxu0 0
    %1548 = vmatpush1.bf16.msra.mxu0 0
    %1549 = vmatprep.subr.bf16.mxu0 0
    %1550 = vmatpush1.bf16.msra.mxu0 0
    %1551 = vmatprep.subr.bf16.mxu0 0
    %1552 = vmatpush1.bf16.msra.mxu0 0
    %1553 = vmatprep.subr.bf16.mxu0 0
    %1554 = vmatpush1.bf16.msra.mxu0 0
    %1555 = vmatprep.subr.bf16.mxu0 0
    %1556 = vmatpush1.bf16.msra.mxu0 0
    %1557 = vmatprep.subr.bf16.mxu0 0
    %1558 = vmatpush1.bf16.msra.mxu0 0
    %1559 = vmatprep.mubr.bf16.mxu0 0
    %1560 = vmatmul.mubr.bf16.gmra.mrb[0].mxu0 %v448
    %v1561 = vpop.f32.mrb[0].mxu0
    %v1562 = vadd.f32 0.0, %v1561
    %v1563 = vpop.f32.mrb[0].mxu0
    %v1564 = vpop.f32.mrb[0].mxu0
    %v1565 = vadd.f32 0.0, %v1564
    %v1566 = vpop.f32.mrb[0].mxu0
    %1567 = vmatprep.mubr.bf16.mxu0 0
    %1568 = vmatmul.mubr.bf16.gmra.mrb[0].mxu0 %v449
    %v1569 = vpop.f32.mrb[0].mxu0
    %v1570 = vadd.f32 0.0, %v1569
    %v1571 = vpop.f32.mrb[0].mxu0
    %v1572 = vpop.f32.mrb[0].mxu0
    %v1573 = vadd.f32 0.0, %v1572
    %v1574 = vpop.f32.mrb[0].mxu0
    %1575 = vmatprep.mubr.bf16.mxu0 0
    %1576 = vmatmul.mubr.bf16.gmra.mrb[0].mxu0 %v450
    %v1577 = vpop.f32.mrb[0].mxu0
    %v1578 = vadd.f32 0.0, %v1577
    %v1579 = vpop.f32.mrb[0].mxu0
    %v1580 = vpop.f32.mrb[0].mxu0
    %v1581 = vadd.f32 0.0, %v1580
    %v1582 = vpop.f32.mrb[0].mxu0
    %1583 = vmatprep.mubr.bf16.mxu0 0
    %1584 = vmatmul.mubr.bf16.gmra.mrb[0].mxu0 %v451
    %v1585 = vpop.f32.mrb[0].mxu0
    %v1586 = vadd.f32 0.0, %v1585
    %v1587 = vpop.f32.mrb[0].mxu0
    %v1588 = vpop.f32.mrb[0].mxu0
    %v1589 = vadd.f32 0.0, %v1588
    %v1590 = vpop.f32.mrb[0].mxu0
    %1591 = vmatprep.mubr.bf16.mxu0 0
    %1592 = vmatmul.mubr.bf16.gmra.mrb[0].mxu0 %v452
    %v1593 = vpop.f32.mrb[0].mxu0
    %v1594 = vadd.f32 0.0, %v1593
    %v1595 = vpop.f32.mrb[0].mxu0
    %v1596 = vpop.f32.mrb[0].mxu0
    %v1597 = vadd.f32 0.0, %v1596
    %v1598 = vpop.f32.mrb[0].mxu0
    %1599 = vmatprep.mubr.bf16.mxu0 0
    %1600 = vmatmul.mubr.bf16.gmra.mrb[0].mxu0 %v453
    %v1601 = vpop.f32.mrb[0].mxu0
    %v1602 = vadd.f32 0.0, %v1601
    %v1603 = vpop.f32.mrb[0].mxu0
    %v1604 = vpop.f32.mrb[0].mxu0
    %v1605 = vadd.f32 0.0, %v1604
    %v1606 = vpop.f32.mrb[0].mxu0
    %1607 = vmatprep.mubr.bf16.mxu0 0
    %1608 = vmatmul.mubr.bf16.gmra.mrb[0].mxu0 %v454
    %v1609 = vpop.f32.mrb[0].mxu0
    %v1610 = vadd.f32 0.0, %v1609
    %v1611 = vpop.f32.mrb[0].mxu0
    %v1612 = vpop.f32.mrb[0].mxu0
    %v1613 = vadd.f32 0.0, %v1612
    %v1614 = vpop.f32.mrb[0].mxu0
    %1615 = vmatprep.mubr.bf16.mxu0 0
    %1616 = vmatmul.mubr.bf16.gmra.mrb[0].mxu0 %v455
    %v1617 = vpop.f32.mrb[0].mxu0
    %v1618 = vadd.f32 0.0, %v1617
    %v1619 = vpop.f32.mrb[0].mxu0
    %v1620 = vpop.f32.mrb[0].mxu0
    %v1621 = vadd.f32 0.0, %v1620
    %v1622 = vpop.f32.mrb[0].mxu0
    %1623 = vdwg.mxu0
    %v1624 = vpack.c.bf16 %v1565, %v1562
    %v1625 = vpack.c.bf16 %v1573, %v1570
    %v1626 = vpack.c.bf16 %v1581, %v1578
    %v1627 = vpack.c.bf16 %v1589, %v1586
    %v1628 = vpack.c.bf16 %v1597, %v1594
    %v1629 = vpack.c.bf16 %v1605, %v1602
    %v1630 = vpack.c.bf16 %v1613, %v1610
    %v1631 = vpack.c.bf16 %v1621, %v1618
    %s1632 = scalar_lea.vmem [#allocation10], 128
    %v1633 = vld [vmem:[%s1632] sm:$0xf]
    %v1634 = vld [vmem:[%s1632 + $0x4] sm:$0xf]
    %v1635 = vld [vmem:[%s1632 + $0x8] sm:$0xf]
    %v1636 = vld [vmem:[%s1632 + $0xc] sm:$0xf]
    %v1637 = vld [vmem:[%s1632 + $0x10] sm:$0xf]
    %v1638 = vld [vmem:[%s1632 + $0x14] sm:$0xf]
    %v1639 = vld [vmem:[%s1632 + $0x18] sm:$0xf]
    %v1640 = vld [vmem:[%s1632 + $0x1c] sm:$0xf]
    %v1641 = vld [vmem:[%s1632 + $0x20] sm:$0xf]
    %v1642 = vld [vmem:[%s1632 + $0x24] sm:$0xf]
    %v1643 = vld [vmem:[%s1632 + $0x28] sm:$0xf]
    %v1644 = vld [vmem:[%s1632 + $0x2c] sm:$0xf]
    %v1645 = vld [vmem:[%s1632 + $0x30] sm:$0xf]
    %v1646 = vld [vmem:[%s1632 + $0x34] sm:$0xf]
    %v1647 = vld [vmem:[%s1632 + $0x38] sm:$0xf]
    %v1648 = vld [vmem:[%s1632 + $0x3c] sm:$0xf]
    %s1649 = scalar_lea.vmem [#allocation12], 128
    %v1650 = vld [vmem:[%s1649] sm:$0xf]
    %v1651 = vld [vmem:[%s1649 + $0x4] sm:$0xf]
    %v1652 = vld [vmem:[%s1649 + $0x8] sm:$0xf]
    %v1653 = vld [vmem:[%s1649 + $0xc] sm:$0xf]
    %v1654 = vld [vmem:[%s1649 + $0x10] sm:$0xf]
    %v1655 = vld [vmem:[%s1649 + $0x14] sm:$0xf]
    %v1656 = vld [vmem:[%s1649 + $0x18] sm:$0xf]
    %v1657 = vld [vmem:[%s1649 + $0x1c] sm:$0xf]
    %v1658 = vld [vmem:[%s1649 + $0x20] sm:$0xf]
    %v1659 = vld [vmem:[%s1649 + $0x24] sm:$0xf]
    %v1660 = vld [vmem:[%s1649 + $0x28] sm:$0xf]
    %v1661 = vld [vmem:[%s1649 + $0x2c] sm:$0xf]
    %v1662 = vld [vmem:[%s1649 + $0x30] sm:$0xf]
    %v1663 = vld [vmem:[%s1649 + $0x34] sm:$0xf]
    %v1664 = vld [vmem:[%s1649 + $0x38] sm:$0xf]
    %v1665 = vld [vmem:[%s1649 + $0x3c] sm:$0xf]
    %v1682 = vunpack.c.l.b16 %v1650
    %v1683 = vunpack.c.l.b16 %v1651
    %v1684 = vunpack.c.l.b16 %v1652
    %v1685 = vunpack.c.l.b16 %v1653
    %v1686 = vunpack.c.l.b16 %v1654
    %v1687 = vunpack.c.l.b16 %v1655
    %v1688 = vunpack.c.l.b16 %v1656
    %v1689 = vunpack.c.l.b16 %v1657
    %v1690 = vunpack.c.l.b16 %v1658
    %v1691 = vunpack.c.l.b16 %v1659
    %v1692 = vunpack.c.l.b16 %v1660
    %v1693 = vunpack.c.l.b16 %v1661
    %v1694 = vunpack.c.l.b16 %v1662
    %v1695 = vunpack.c.l.b16 %v1663
    %v1696 = vunpack.c.l.b16 %v1664
    %v1697 = vunpack.c.l.b16 %v1665
    %v1698 = vpack.c.b16 %v1683, %v1682
    %v1699 = vpack.c.b16 %v1685, %v1684
    %v1700 = vpack.c.b16 %v1687, %v1686
    %v1701 = vpack.c.b16 %v1689, %v1688
    %v1702 = vpack.c.b16 %v1691, %v1690
    %v1703 = vpack.c.b16 %v1693, %v1692
    %v1704 = vpack.c.b16 %v1695, %v1694
    %v1705 = vpack.c.b16 %v1697, %v1696
    %1714 = vmatprep.subr.bf16.mxu0 0
    %1715 = vmatpush1.bf16.msra.mxu0 %v1698
    %1716 = vmatprep.subr.bf16.mxu0 0
    %1717 = vmatpush1.bf16.msra.mxu0 %v1699
    %1718 = vmatprep.subr.bf16.mxu0 0
    %1719 = vmatpush1.bf16.msra.mxu0 %v1700
    %1720 = vmatprep.subr.bf16.mxu0 0
    %1721 = vmatpush1.bf16.msra.mxu0 %v1701
    %1722 = vmatprep.subr.bf16.mxu0 0
    %1723 = vmatpush1.bf16.msra.mxu0 %v1702
    %1724 = vmatprep.subr.bf16.mxu0 0
    %1725 = vmatpush1.bf16.msra.mxu0 %v1703
    %1726 = vmatprep.subr.bf16.mxu0 0
    %1727 = vmatpush1.bf16.msra.mxu0 %v1704
    %1728 = vmatprep.subr.bf16.mxu0 0
    %1729 = vmatpush1.bf16.msra.mxu0 %v1705
    %1730 = vmatprep.subr.bf16.mxu0 0
    %1731 = vmatpush1.bf16.msra.mxu0 0
    %1732 = vmatprep.subr.bf16.mxu0 0
    %1733 = vmatpush1.bf16.msra.mxu0 0
    %1734 = vmatprep.subr.bf16.mxu0 0
    %1735 = vmatpush1.bf16.msra.mxu0 0
    %1736 = vmatprep.subr.bf16.mxu0 0
    %1737 = vmatpush1.bf16.msra.mxu0 0
    %1738 = vmatprep.subr.bf16.mxu0 0
    %1739 = vmatpush1.bf16.msra.mxu0 0
    %1740 = vmatprep.subr.bf16.mxu0 0
    %1741 = vmatpush1.bf16.msra.mxu0 0
    %1742 = vmatprep.subr.bf16.mxu0 0
    %1743 = vmatpush1.bf16.msra.mxu0 0
    %1744 = vmatprep.subr.bf16.mxu0 0
    %1745 = vmatpush1.bf16.msra.mxu0 0
    %1746 = vmatprep.mubr.bf16.mxu0 0
    %1747 = vmatmul.mubr.bf16.gmra.mrb[0].mxu0 %v1519
    %v1748 = vpop.f32.mrb[0].mxu0
    %v1749 = vadd.f32 0.0, %v1748
    %v1750 = vpop.f32.mrb[0].mxu0
    %v1751 = vpop.f32.mrb[0].mxu0
    %v1752 = vadd.f32 0.0, %v1751
    %v1753 = vpop.f32.mrb[0].mxu0
    %1754 = vmatprep.mubr.bf16.mxu0 0
    %1755 = vmatmul.mubr.bf16.gmra.mrb[0].mxu0 %v1520
    %v1756 = vpop.f32.mrb[0].mxu0
    %v1757 = vadd.f32 0.0, %v1756
    %v1758 = vpop.f32.mrb[0].mxu0
    %v1759 = vpop.f32.mrb[0].mxu0
    %v1760 = vadd.f32 0.0, %v1759
    %v1761 = vpop.f32.mrb[0].mxu0
    %1762 = vmatprep.mubr.bf16.mxu0 0
    %1763 = vmatmul.mubr.bf16.gmra.mrb[0].mxu0 %v1521
    %v1764 = vpop.f32.mrb[0].mxu0
    %v1765 = vadd.f32 0.0, %v1764
    %v1766 = vpop.f32.mrb[0].mxu0
    %v1767 = vpop.f32.mrb[0].mxu0
    %v1768 = vadd.f32 0.0, %v1767
    %v1769 = vpop.f32.mrb[0].mxu0
    %1770 = vmatprep.mubr.bf16.mxu0 0
    %1771 = vmatmul.mubr.bf16.gmra.mrb[0].mxu0 %v1522
    %v1772 = vpop.f32.mrb[0].mxu0
    %v1773 = vadd.f32 0.0, %v1772
    %v1774 = vpop.f32.mrb[0].mxu0
    %v1775 = vpop.f32.mrb[0].mxu0
    %v1776 = vadd.f32 0.0, %v1775
    %v1777 = vpop.f32.mrb[0].mxu0
    %1778 = vmatprep.mubr.bf16.mxu0 0
    %1779 = vmatmul.mubr.bf16.gmra.mrb[0].mxu0 %v1523
    %v1780 = vpop.f32.mrb[0].mxu0
    %v1781 = vadd.f32 0.0, %v1780
    %v1782 = vpop.f32.mrb[0].mxu0
    %v1783 = vpop.f32.mrb[0].mxu0
    %v1784 = vadd.f32 0.0, %v1783
    %v1785 = vpop.f32.mrb[0].mxu0
    %1786 = vmatprep.mubr.bf16.mxu0 0
    %1787 = vmatmul.mubr.bf16.gmra.mrb[0].mxu0 %v1524
    %v1788 = vpop.f32.mrb[0].mxu0
    %v1789 = vadd.f32 0.0, %v1788
    %v1790 = vpop.f32.mrb[0].mxu0
    %v1791 = vpop.f32.mrb[0].mxu0
    %v1792 = vadd.f32 0.0, %v1791
    %v1793 = vpop.f32.mrb[0].mxu0
    %1794 = vmatprep.mubr.bf16.mxu0 0
    %1795 = vmatmul.mubr.bf16.gmra.mrb[0].mxu0 %v1525
    %v1796 = vpop.f32.mrb[0].mxu0
    %v1797 = vadd.f32 0.0, %v1796
    %v1798 = vpop.f32.mrb[0].mxu0
    %v1799 = vpop.f32.mrb[0].mxu0
    %v1800 = vadd.f32 0.0, %v1799
    %v1801 = vpop.f32.mrb[0].mxu0
    %1802 = vmatprep.mubr.bf16.mxu0 0
    %1803 = vmatmul.mubr.bf16.gmra.mrb[0].mxu0 %v1526
    %v1804 = vpop.f32.mrb[0].mxu0
    %v1805 = vadd.f32 0.0, %v1804
    %v1806 = vpop.f32.mrb[0].mxu0
    %v1807 = vpop.f32.mrb[0].mxu0
    %v1808 = vadd.f32 0.0, %v1807
    %v1809 = vpop.f32.mrb[0].mxu0
    %1810 = vdwg.mxu0
    %v1827 = vunpack.c.l.b16 %v1633
    %v1828 = vunpack.c.l.b16 %v1634
    %v1829 = vunpack.c.l.b16 %v1635
    %v1830 = vunpack.c.l.b16 %v1636
    %v1831 = vunpack.c.l.b16 %v1637
    %v1832 = vunpack.c.l.b16 %v1638
    %v1833 = vunpack.c.l.b16 %v1639
    %v1834 = vunpack.c.l.b16 %v1640
    %v1835 = vunpack.c.l.b16 %v1641
    %v1836 = vunpack.c.l.b16 %v1642
    %v1837 = vunpack.c.l.b16 %v1643
    %v1838 = vunpack.c.l.b16 %v1644
    %v1839 = vunpack.c.l.b16 %v1645
    %v1840 = vunpack.c.l.b16 %v1646
    %v1841 = vunpack.c.l.b16 %v1647
    %v1842 = vunpack.c.l.b16 %v1648
    %v1843 = vpack.c.b16 %v1828, %v1827
    %v1844 = vpack.c.b16 %v1830, %v1829
    %v1845 = vpack.c.b16 %v1832, %v1831
    %v1846 = vpack.c.b16 %v1834, %v1833
    %v1847 = vpack.c.b16 %v1836, %v1835
    %v1848 = vpack.c.b16 %v1838, %v1837
    %v1849 = vpack.c.b16 %v1840, %v1839
    %v1850 = vpack.c.b16 %v1842, %v1841
    %1859 = vmatprep.subr.bf16.mxu0 0
    %1860 = vmatpush1.bf16.msra.mxu0 %v1843
    %1861 = vmatprep.subr.bf16.mxu0 0
    %1862 = vmatpush1.bf16.msra.mxu0 %v1844
    %1863 = vmatprep.subr.bf16.mxu0 0
    %1864 = vmatpush1.bf16.msra.mxu0 %v1845
    %1865 = vmatprep.subr.bf16.mxu0 0
    %1866 = vmatpush1.bf16.msra.mxu0 %v1846
    %1867 = vmatprep.subr.bf16.mxu0 0
    %1868 = vmatpush1.bf16.msra.mxu0 %v1847
    %1869 = vmatprep.subr.bf16.mxu0 0
    %1870 = vmatpush1.bf16.msra.mxu0 %v1848
    %1871 = vmatprep.subr.bf16.mxu0 0
    %1872 = vmatpush1.bf16.msra.mxu0 %v1849
    %1873 = vmatprep.subr.bf16.mxu0 0
    %1874 = vmatpush1.bf16.msra.mxu0 %v1850
    %1875 = vmatprep.subr.bf16.mxu0 0
    %1876 = vmatpush1.bf16.msra.mxu0 0
    %1877 = vmatprep.subr.bf16.mxu0 0
    %1878 = vmatpush1.bf16.msra.mxu0 0
    %1879 = vmatprep.subr.bf16.mxu0 0
    %1880 = vmatpush1.bf16.msra.mxu0 0
    %1881 = vmatprep.subr.bf16.mxu0 0
    %1882 = vmatpush1.bf16.msra.mxu0 0
    %1883 = vmatprep.subr.bf16.mxu0 0
    %1884 = vmatpush1.bf16.msra.mxu0 0
    %1885 = vmatprep.subr.bf16.mxu0 0
    %1886 = vmatpush1.bf16.msra.mxu0 0
    %1887 = vmatprep.subr.bf16.mxu0 0
    %1888 = vmatpush1.bf16.msra.mxu0 0
    %1889 = vmatprep.subr.bf16.mxu0 0
    %1890 = vmatpush1.bf16.msra.mxu0 0
    %1891 = vmatprep.mubr.bf16.mxu0 0
    %1892 = vmatmul.mubr.bf16.gmra.mrb[0].mxu0 %v1624
    %v1893 = vpop.f32.mrb[0].mxu0
    %v1894 = vadd.f32 %v1749, %v1893
    %v1895 = vpop.f32.mrb[0].mxu0
    %v1896 = vpop.f32.mrb[0].mxu0
    %v1897 = vadd.f32 %v1752, %v1896
    %v1898 = vpop.f32.mrb[0].mxu0
    %1899 = vmatprep.mubr.bf16.mxu0 0
    %1900 = vmatmul.mubr.bf16.gmra.mrb[0].mxu0 %v1625
    %v1901 = vpop.f32.mrb[0].mxu0
    %v1902 = vadd.f32 %v1757, %v1901
    %v1903 = vpop.f32.mrb[0].mxu0
    %v1904 = vpop.f32.mrb[0].mxu0
    %v1905 = vadd.f32 %v1760, %v1904
    %v1906 = vpop.f32.mrb[0].mxu0
    %1907 = vmatprep.mubr.bf16.mxu0 0
    %1908 = vmatmul.mubr.bf16.gmra.mrb[0].mxu0 %v1626
    %v1909 = vpop.f32.mrb[0].mxu0
    %v1910 = vadd.f32 %v1765, %v1909
    %v1911 = vpop.f32.mrb[0].mxu0
    %v1912 = vpop.f32.mrb[0].mxu0
    %v1913 = vadd.f32 %v1768, %v1912
    %v1914 = vpop.f32.mrb[0].mxu0
    %1915 = vmatprep.mubr.bf16.mxu0 0
    %1916 = vmatmul.mubr.bf16.gmra.mrb[0].mxu0 %v1627
    %v1917 = vpop.f32.mrb[0].mxu0
    %v1918 = vadd.f32 %v1773, %v1917
    %v1919 = vpop.f32.mrb[0].mxu0
    %v1920 = vpop.f32.mrb[0].mxu0
    %v1921 = vadd.f32 %v1776, %v1920
    %v1922 = vpop.f32.mrb[0].mxu0
    %1923 = vmatprep.mubr.bf16.mxu0 0
    %1924 = vmatmul.mubr.bf16.gmra.mrb[0].mxu0 %v1628
    %v1925 = vpop.f32.mrb[0].mxu0
    %v1926 = vadd.f32 %v1781, %v1925
    %v1927 = vpop.f32.mrb[0].mxu0
    %v1928 = vpop.f32.mrb[0].mxu0
    %v1929 = vadd.f32 %v1784, %v1928
    %v1930 = vpop.f32.mrb[0].mxu0
    %1931 = vmatprep.mubr.bf16.mxu0 0
    %1932 = vmatmul.mubr.bf16.gmra.mrb[0].mxu0 %v1629
    %v1933 = vpop.f32.mrb[0].mxu0
    %v1934 = vadd.f32 %v1789, %v1933
    %v1935 = vpop.f32.mrb[0].mxu0
    %v1936 = vpop.f32.mrb[0].mxu0
    %v1937 = vadd.f32 %v1792, %v1936
    %v1938 = vpop.f32.mrb[0].mxu0
    %1939 = vmatprep.mubr.bf16.mxu0 0
    %1940 = vmatmul.mubr.bf16.gmra.mrb[0].mxu0 %v1630
    %v1941 = vpop.f32.mrb[0].mxu0
    %v1942 = vadd.f32 %v1797, %v1941
    %v1943 = vpop.f32.mrb[0].mxu0
    %v1944 = vpop.f32.mrb[0].mxu0
    %v1945 = vadd.f32 %v1800, %v1944
    %v1946 = vpop.f32.mrb[0].mxu0
    %1947 = vmatprep.mubr.bf16.mxu0 0
    %1948 = vmatmul.mubr.bf16.gmra.mrb[0].mxu0 %v1631
    %v1949 = vpop.f32.mrb[0].mxu0
    %v1950 = vadd.f32 %v1805, %v1949
    %v1951 = vpop.f32.mrb[0].mxu0
    %v1952 = vpop.f32.mrb[0].mxu0
    %v1953 = vadd.f32 %v1808, %v1952
    %v1954 = vpop.f32.mrb[0].mxu0
    %1955 = vdwg.mxu0
    %s1956 = scalar_lea.vmem %s6, 2
    %v1957 = vld [vmem:[%s1956] sm:$0x1]
    %v1959 = vlaneseq
    %v1960 = vshrl.u32 %v1959, 7
    %v1961 = vsub.s32 0, %v1960
    %v1962 = vrot.slane %v1957, %v1961
    %v1964 = vadd.f32 %v1894, %v1962
    %v1965 = vadd.f32 %v1897, %v1962
    %v1966 = vadd.f32 %v1902, %v1962
    %v1967 = vadd.f32 %v1905, %v1962
    %v1968 = vadd.f32 %v1910, %v1962
    %v1969 = vadd.f32 %v1913, %v1962
    %v1970 = vadd.f32 %v1918, %v1962
    %v1971 = vadd.f32 %v1921, %v1962
    %v1972 = vadd.f32 %v1926, %v1962
    %v1973 = vadd.f32 %v1929, %v1962
    %v1974 = vadd.f32 %v1934, %v1962
    %v1975 = vadd.f32 %v1937, %v1962
    %v1976 = vadd.f32 %v1942, %v1962
    %v1977 = vadd.f32 %v1945, %v1962
    %v1978 = vadd.f32 %v1950, %v1962
    %v1979 = vadd.f32 %v1953, %v1962
    %v1980 = vlaneseq
    %v1981 = vand.u32 %v1980, 127
    %vm1982 = vcmp.lt.s32.totalorder %v1981, 8
    %v1983 = vsel %vm1982, %v1964, -1e+30
    %v1984 = vsel %vm1982, %v1965, -1e+30
    %v1985 = vsel %vm1982, %v1966, -1e+30
    %v1986 = vsel %vm1982, %v1967, -1e+30
    %v1987 = vsel %vm1982, %v1968, -1e+30
    %v1988 = vsel %vm1982, %v1969, -1e+30
    %v1989 = vsel %vm1982, %v1970, -1e+30
    %v1990 = vsel %vm1982, %v1971, -1e+30
    %v1991 = vsel %vm1982, %v1972, -1e+30
    %v1992 = vsel %vm1982, %v1973, -1e+30
    %v1993 = vsel %vm1982, %v1974, -1e+30
    %v1994 = vsel %vm1982, %v1975, -1e+30
    %v1995 = vsel %vm1982, %v1976, -1e+30
    %v1996 = vsel %vm1982, %v1977, -1e+30
    %v1997 = vsel %vm1982, %v1978, -1e+30
    %v1998 = vsel %vm1982, %v1979, -1e+30
    %1999 = vmax.xlane.f32.xlu0 %v1983
    %v2000 = vpop.xlane.xlu0 %1999
    %2001 = vmax.xlane.f32.xlu0 %v1984
    %v2002 = vpop.xlane.xlu0 %2001
    %2003 = vmax.xlane.f32.xlu0 %v1985
    %v2004 = vpop.xlane.xlu0 %2003
    %2005 = vmax.xlane.f32.xlu0 %v1986
    %v2006 = vpop.xlane.xlu0 %2005
    %2007 = vmax.xlane.f32.xlu0 %v1987
    %v2008 = vpop.xlane.xlu0 %2007
    %2009 = vmax.xlane.f32.xlu0 %v1988
    %v2010 = vpop.xlane.xlu0 %2009
    %2011 = vmax.xlane.f32.xlu0 %v1989
    %v2012 = vpop.xlane.xlu0 %2011
    %2013 = vmax.xlane.f32.xlu0 %v1990
    %v2014 = vpop.xlane.xlu0 %2013
    %2015 = vmax.xlane.f32.xlu0 %v1991
    %v2016 = vpop.xlane.xlu0 %2015
    %2017 = vmax.xlane.f32.xlu0 %v1992
    %v2018 = vpop.xlane.xlu0 %2017
    %2019 = vmax.xlane.f32.xlu0 %v1993
    %v2020 = vpop.xlane.xlu0 %2019
    %2021 = vmax.xlane.f32.xlu0 %v1994
    %v2022 = vpop.xlane.xlu0 %2021
    %2023 = vmax.xlane.f32.xlu0 %v1995
    %v2024 = vpop.xlane.xlu0 %2023
    %2025 = vmax.xlane.f32.xlu0 %v1996
    %v2026 = vpop.xlane.xlu0 %2025
    %2027 = vmax.xlane.f32.xlu0 %v1997
    %v2028 = vpop.xlane.xlu0 %2027
    %2029 = vmax.xlane.f32.xlu0 %v1998
    %v2030 = vpop.xlane.xlu0 %2029
    %v2031 = vsub.f32 %v1983, %v2000
    %v2032 = vsub.f32 %v1984, %v2002
    %v2033 = vsub.f32 %v1985, %v2004
    %v2034 = vsub.f32 %v1986, %v2006
    %v2035 = vsub.f32 %v1987, %v2008
    %v2036 = vsub.f32 %v1988, %v2010
    %v2037 = vsub.f32 %v1989, %v2012
    %v2038 = vsub.f32 %v1990, %v2014
    %v2039 = vsub.f32 %v1991, %v2016
    %v2040 = vsub.f32 %v1992, %v2018
    %v2041 = vsub.f32 %v1993, %v2020
    %v2042 = vsub.f32 %v1994, %v2022
    %v2043 = vsub.f32 %v1995, %v2024
    %v2044 = vsub.f32 %v1996, %v2026
    %v2045 = vsub.f32 %v1997, %v2028
    %v2046 = vsub.f32 %v1998, %v2030
    %v2047 = vmul.f32 %v2031, 1.442695
    %v2048 = vpow.pop %v2047
    %v2049 = vmul.f32 %v2032, 1.442695
    %v2050 = vpow.pop %v2049
    %v2051 = vmul.f32 %v2033, 1.442695
    %v2052 = vpow.pop %v2051
    %v2053 = vmul.f32 %v2034, 1.442695
    %v2054 = vpow.pop %v2053
    %v2055 = vmul.f32 %v2035, 1.442695
    %v2056 = vpow.pop %v2055
    %v2057 = vmul.f32 %v2036, 1.442695
    %v2058 = vpow.pop %v2057
    %v2059 = vmul.f32 %v2037, 1.442695
    %v2060 = vpow.pop %v2059
    %v2061 = vmul.f32 %v2038, 1.442695
    %v2062 = vpow.pop %v2061
    %v2063 = vmul.f32 %v2039, 1.442695
    %v2064 = vpow.pop %v2063
    %v2065 = vmul.f32 %v2040, 1.442695
    %v2066 = vpow.pop %v2065
    %v2067 = vmul.f32 %v2041, 1.442695
    %v2068 = vpow.pop %v2067
    %v2069 = vmul.f32 %v2042, 1.442695
    %v2070 = vpow.pop %v2069
    %v2071 = vmul.f32 %v2043, 1.442695
    %v2072 = vpow.pop %v2071
    %v2073 = vmul.f32 %v2044, 1.442695
    %v2074 = vpow.pop %v2073
    %v2075 = vmul.f32 %v2045, 1.442695
    %v2076 = vpow.pop %v2075
    %v2077 = vmul.f32 %v2046, 1.442695
    %v2078 = vpow.pop %v2077
    %2079 = vadd.xlane.f32.xlu0 %v2048
    %v2080 = vpop.xlane.xlu0 %2079
    %2081 = vadd.xlane.f32.xlu0 %v2050
    %v2082 = vpop.xlane.xlu0 %2081
    %2083 = vadd.xlane.f32.xlu0 %v2052
    %v2084 = vpop.xlane.xlu0 %2083
    %2085 = vadd.xlane.f32.xlu0 %v2054
    %v2086 = vpop.xlane.xlu0 %2085
    %2087 = vadd.xlane.f32.xlu0 %v2056
    %v2088 = vpop.xlane.xlu0 %2087
    %2089 = vadd.xlane.f32.xlu0 %v2058
    %v2090 = vpop.xlane.xlu0 %2089
    %2091 = vadd.xlane.f32.xlu0 %v2060
    %v2092 = vpop.xlane.xlu0 %2091
    %2093 = vadd.xlane.f32.xlu0 %v2062
    %v2094 = vpop.xlane.xlu0 %2093
    %2095 = vadd.xlane.f32.xlu0 %v2064
    %v2096 = vpop.xlane.xlu0 %2095
    %2097 = vadd.xlane.f32.xlu0 %v2066
    %v2098 = vpop.xlane.xlu0 %2097
    %2099 = vadd.xlane.f32.xlu0 %v2068
    %v2100 = vpop.xlane.xlu0 %2099
    %2101 = vadd.xlane.f32.xlu0 %v2070
    %v2102 = vpop.xlane.xlu0 %2101
    %2103 = vadd.xlane.f32.xlu0 %v2072
    %v2104 = vpop.xlane.xlu0 %2103
    %2105 = vadd.xlane.f32.xlu0 %v2074
    %v2106 = vpop.xlane.xlu0 %2105
    %2107 = vadd.xlane.f32.xlu0 %v2076
    %v2108 = vpop.xlane.xlu0 %2107
    %2109 = vadd.xlane.f32.xlu0 %v2078
    %v2110 = vpop.xlane.xlu0 %2109
    %v2111 = vlog2.pop %v2080
    %v2112 = vmul.f32 %v2111, 0.6931472
    %v2113 = vlog2.pop %v2082
    %v2114 = vmul.f32 %v2113, 0.6931472
    %v2115 = vlog2.pop %v2084
    %v2116 = vmul.f32 %v2115, 0.6931472
    %v2117 = vlog2.pop %v2086
    %v2118 = vmul.f32 %v2117, 0.6931472
    %v2119 = vlog2.pop %v2088
    %v2120 = vmul.f32 %v2119, 0.6931472
    %v2121 = vlog2.pop %v2090
    %v2122 = vmul.f32 %v2121, 0.6931472
    %v2123 = vlog2.pop %v2092
    %v2124 = vmul.f32 %v2123, 0.6931472
    %v2125 = vlog2.pop %v2094
    %v2126 = vmul.f32 %v2125, 0.6931472
    %v2127 = vlog2.pop %v2096
    %v2128 = vmul.f32 %v2127, 0.6931472
    %v2129 = vlog2.pop %v2098
    %v2130 = vmul.f32 %v2129, 0.6931472
    %v2131 = vlog2.pop %v2100
    %v2132 = vmul.f32 %v2131, 0.6931472
    %v2133 = vlog2.pop %v2102
    %v2134 = vmul.f32 %v2133, 0.6931472
    %v2135 = vlog2.pop %v2104
    %v2136 = vmul.f32 %v2135, 0.6931472
    %v2137 = vlog2.pop %v2106
    %v2138 = vmul.f32 %v2137, 0.6931472
    %v2139 = vlog2.pop %v2108
    %v2140 = vmul.f32 %v2139, 0.6931472
    %v2141 = vlog2.pop %v2110
    %v2142 = vmul.f32 %v2141, 0.6931472
    %v2143 = vsub.f32 %v2031, %v2112
    %v2144 = vsub.f32 %v2032, %v2114
    %v2145 = vsub.f32 %v2033, %v2116
    %v2146 = vsub.f32 %v2034, %v2118
    %v2147 = vsub.f32 %v2035, %v2120
    %v2148 = vsub.f32 %v2036, %v2122
    %v2149 = vsub.f32 %v2037, %v2124
    %v2150 = vsub.f32 %v2038, %v2126
    %v2151 = vsub.f32 %v2039, %v2128
    %v2152 = vsub.f32 %v2040, %v2130
    %v2153 = vsub.f32 %v2041, %v2132
    %v2154 = vsub.f32 %v2042, %v2134
    %v2155 = vsub.f32 %v2043, %v2136
    %v2156 = vsub.f32 %v2044, %v2138
    %v2157 = vsub.f32 %v2045, %v2140
    %v2158 = vsub.f32 %v2046, %v2142
    %v2159 = vpack.c.bf16 %v2144, %v2143
    %v2160 = vpack.c.bf16 %v2146, %v2145
    %v2161 = vpack.c.bf16 %v2148, %v2147
    %v2162 = vpack.c.bf16 %v2150, %v2149
    %v2163 = vpack.c.bf16 %v2152, %v2151
    %v2164 = vpack.c.bf16 %v2154, %v2153
    %v2165 = vpack.c.bf16 %v2156, %v2155
    %v2166 = vpack.c.bf16 %v2158, %v2157
    %v2175 = vunpack.c.l.b16 %v2159
    %v2176 = vunpack.c.h.b16 %v2159
    %v2177 = vunpack.c.l.b16 %v2160
    %v2178 = vunpack.c.h.b16 %v2160
    %v2179 = vunpack.c.l.b16 %v2161
    %v2180 = vunpack.c.h.b16 %v2161
    %v2181 = vunpack.c.l.b16 %v2162
    %v2182 = vunpack.c.h.b16 %v2162
    %v2183 = vunpack.c.l.b16 %v2163
    %v2184 = vunpack.c.h.b16 %v2163
    %v2185 = vunpack.c.l.b16 %v2164
    %v2186 = vunpack.c.h.b16 %v2164
    %v2187 = vunpack.c.l.b16 %v2165
    %v2188 = vunpack.c.h.b16 %v2165
    %v2189 = vunpack.c.l.b16 %v2166
    %v2190 = vunpack.c.h.b16 %v2166
    %v2191 = vpack.c.b16 %v2175, %v2175
    %v2192 = vpack.c.b16 %v2176, %v2176
    %v2193 = vpack.c.b16 %v2177, %v2177
    %v2194 = vpack.c.b16 %v2178, %v2178
    %v2195 = vpack.c.b16 %v2179, %v2179
    %v2196 = vpack.c.b16 %v2180, %v2180
    %v2197 = vpack.c.b16 %v2181, %v2181
    %v2198 = vpack.c.b16 %v2182, %v2182
    %v2199 = vpack.c.b16 %v2183, %v2183
    %v2200 = vpack.c.b16 %v2184, %v2184
    %v2201 = vpack.c.b16 %v2185, %v2185
    %v2202 = vpack.c.b16 %v2186, %v2186
    %v2203 = vpack.c.b16 %v2187, %v2187
    %v2204 = vpack.c.b16 %v2188, %v2188
    %v2205 = vpack.c.b16 %v2189, %v2189
    %v2206 = vpack.c.b16 %v2190, %v2190
    %2223 = vst [vmem:[#allocation13] sm:$0xf] %v2191
    %2224 = vst [vmem:[#allocation13 + $0x4] sm:$0xf] %v2192
    %2225 = vst [vmem:[#allocation13 + $0x8] sm:$0xf] %v2193
    %2226 = vst [vmem:[#allocation13 + $0xc] sm:$0xf] %v2194
    %2227 = vst [vmem:[#allocation13 + $0x10] sm:$0xf] %v2195
    %2228 = vst [vmem:[#allocation13 + $0x14] sm:$0xf] %v2196
    %2229 = vst [vmem:[#allocation13 + $0x18] sm:$0xf] %v2197
    %2230 = vst [vmem:[#allocation13 + $0x1c] sm:$0xf] %v2198
    %2231 = vst [vmem:[#allocation13 + $0x20] sm:$0xf] %v2199
    %2232 = vst [vmem:[#allocation13 + $0x24] sm:$0xf] %v2200
    %2233 = vst [vmem:[#allocation13 + $0x28] sm:$0xf] %v2201
    %2234 = vst [vmem:[#allocation13 + $0x2c] sm:$0xf] %v2202
    %2235 = vst [vmem:[#allocation13 + $0x30] sm:$0xf] %v2203
    %2236 = vst [vmem:[#allocation13 + $0x34] sm:$0xf] %v2204
    %2237 = vst [vmem:[#allocation13 + $0x38] sm:$0xf] %v2205
    %2238 = vst [vmem:[#allocation13 + $0x3c] sm:$0xf] %v2206
    // Predicated region
    $region50: #{gcn_forward.1} parent=1 // pred_check
      _
    $region51: #{gcn_forward.1} parent=1 // pred_check_branch
      %2240 = sbr.rel (0) target = $region53
    $region52: #{gcn_forward.1} parent=1 // pred_region
      %s2242 = ssub.s32 1024, 1024
      %2243 = vsyncadd [#allocation6], %s2242
      %s2244 = sshll.u32 [#allocation13], 4
      %s2245 = int_to_ptr.vmem [resolvable:$true] %s2244
      %2250 = dma.vmem_to_hbm [thread:$0]  %s2245, 1024, %s7, [#allocation6], 64, 64, 4
    $region53: #{gcn_forward.1} parent=1 // pred_fallthru
      _
    // Predicated region
    $region54: #{gcn_forward.1} parent=1 // pred_check
      _
    $region55: #{gcn_forward.1} parent=1 // pred_check_branch
      %2252 = sbr.rel (0) target = $region57
    $region56: #{gcn_forward.1} parent=1 // pred_region
      %2253 = dma.done [#allocation6], 1024
    $region57: #{gcn_forward.1} parent=1 // pred_fallthru
      _
    %2254 = vsyncpa [#allocation5], 1
    %2255 = vsyncpa [#allocation8], 1
    %2256 = vsyncpa [#allocation11], 1
    %2257 = vsyncpa [#allocation6], 1

</llo_original>
